<compile_context>
chip_gen: v7x
topology: tpu7x:2x2x1
jax: 0.10.0
libtpu: 0.0.40
codegen_flags: <defaults>
</compile_context>

<pallas_src>
import functools

import jax
import jax.numpy as jnp
from jax.experimental import pallas as pl
from jax.experimental.pallas import tpu as pltpu

EPS = 1e-5  # PyTorch InstanceNorm2d default eps


# ----------------------------------------------------------------------------
# Fused kernel: one grid step == one batch element
# ----------------------------------------------------------------------------
def _residual_block_kernel(x_ref, film_ref, w1_ref, w2_ref, b_ref, masks_ref,
                           out_ref, xpad_ref, hpad_ref, *, width, off):
    """Refs:
      x_ref    : (C, H*W)            input sample, lane-dense
      film_ref : (4*C, 1)            [gamma1; beta1; gamma2; beta2]
      w1_ref   : (9, C, C)           conv1 taps (ky,kx row-major), each (Cout, Cin)
      w2_ref   : (9, C, C)           conv2 taps
      b_ref    : (2*C, 1)            [bias1; bias2]
      masks_ref: (2, H*W)            column masks for dx=-1 / dx=+1 taps
      out_ref  : (C, H*W)
      xpad_ref, hpad_ref : VMEM (C, H*W + 2*off) f32 flat zero-padded scratch
    """
    C, HW = out_ref.shape
    W = width
    OFF = off

    mask_l = masks_ref[0:1, :]   # zero where w == 0     (for dx = -1 taps)
    mask_r = masks_ref[1:2, :]   # zero where w == W - 1 (for dx = +1 taps)

    def conv3x3(pad_ref, w_ref, bias):
        src = pad_ref[...]                                   # (Cin, HW + 2*OFF)
        acc = jnp.zeros((C, HW), jnp.float32)
        t = 0
        for dy in (-1, 0, 1):
            for dx in (-1, 0, 1):
                start = OFF + dy * W + dx                    # static lane offset
                patch = src[:, start:start + HW]             # (Cin, HW)
                if dx == -1:
                    patch = patch * mask_l
                elif dx == 1:
                    patch = patch * mask_r
                # per-tap contraction over input channels (MXU, f32 accumulate)
                acc = acc + jnp.dot(w_ref[t], patch,
                                    preferred_element_type=jnp.float32)
                t += 1
        return acc + bias                                    # bias (Cout,1) bcast

    def cond_instance_norm(h, gamma, beta):
        mean = jnp.mean(h, axis=1, keepdims=True)            # (C,1) lane reduce
        cen = h - mean
        var = jnp.mean(cen * cen, axis=1, keepdims=True)     # biased variance
        return gamma * (cen * jax.lax.rsqrt(var + EPS)) + beta

    x = x_ref[...].astype(jnp.float32)

    # -- stage 1: conv1 -> CIN1 -> relu ---------------------------------------
    xpad_ref[...] = jnp.zeros_like(xpad_ref)                 # re-zero every step
    xpad_ref[:, OFF:OFF + HW] = x                            # lane-aligned store
    h = conv3x3(xpad_ref, w1_ref, b_ref[0:C, :])
    h = cond_instance_norm(h, film_ref[0:C, :], film_ref[C:2 * C, :])
    h = jnp.maximum(h, 0.0)

    # -- stage 2: conv2 -> CIN2 -> +identity -> relu (h1 stays in VMEM) -------
    hpad_ref[...] = jnp.zeros_like(hpad_ref)
    hpad_ref[:, OFF:OFF + HW] = h
    h2 = conv3x3(hpad_ref, w2_ref, b_ref[C:2 * C, :])
    h2 = cond_instance_norm(h2, film_ref[2 * C:3 * C, :], film_ref[3 * C:4 * C, :])

    out_ref[...] = jnp.maximum(h2 + x, 0.0).astype(out_ref.dtype)


# ----------------------------------------------------------------------------
# Wrapper: plain-JAX glue (FiLM precompute, weight packing) + pallas_call
# ----------------------------------------------------------------------------
def _padded_block_bytes(shape, itemsize=4):
    """Rough (8,128)-tiled VMEM footprint of one block / scratch buffer."""
    s = (1, 1) + tuple(shape)
    lead = 1
    for d in s[:-2]:
        lead *= d
    sub = -(-s[-2] // 8) * 8
    lane = -(-s[-1] // 128) * 128
    return lead * sub * lane * itemsize


def residual_block_forward(x, angles, params):
    B, C, H, W = x.shape
    HW = H * W
    OFF = -(-(W + 1) // 128) * 128          # halo >= W+1, lane-aligned interior
    pad_len = HW + 2 * OFF

    # --- cheap wrapper-side glue (no activation copies) ----------------------
    x_flat = x.reshape(B, C, HW)

    # FiLM scalars of both conditional instance norms, packed as (B, 4C, 1).
    def lin(w, b):
        return angles.astype(jnp.float32) @ w.T + b.reshape(1, -1)
    film = jnp.concatenate(
        [lin(params["g1w"], params["g1b"]), lin(params["be1w"], params["be1b"]),
         lin(params["g2w"], params["g2b"]), lin(params["be2w"], params["be2b"])],
        axis=1).reshape(B, 4 * C, 1)

    # Conv weights (Cout, Cin, kH, kW) -> (9, Cout, Cin), taps in (ky,kx) order.
    def taps(w):
        return jnp.transpose(w, (2, 3, 0, 1)).reshape(9, C, C).astype(jnp.float32)
    w1, w2 = taps(params["w1"]), taps(params["w2"])
    b12 = jnp.concatenate([params["b1"], params["b2"]]).reshape(2 * C, 1)
    b12 = b12.astype(jnp.float32)

    # Column masks removing the row-wrap reads of the dx=-1 / dx=+1 taps.
    col = jnp.arange(HW, dtype=jnp.int32) % W
    masks = jnp.stack([(col != 0).astype(jnp.float32),
                       (col != W - 1).astype(jnp.float32)])          # (2, HW)

    # --- explicit VMEM budget: double-buffered blocks + scratch + headroom ---
    block_bytes = sum(_padded_block_bytes(s) for s in
                      [(C, HW), (4 * C, 1), (9, C, C), (9, C, C),
                       (2 * C, 1), (2, HW), (C, HW)])
    vmem_limit = 2 * block_bytes + 2 * _padded_block_bytes((C, pad_len)) + (2 << 20)
    vmem_limit = int(min(max(vmem_limit, 8 << 20), 32 << 20))

    kernel = functools.partial(_residual_block_kernel, width=W, off=OFF)

    out_flat = pl.pallas_call(
        kernel,
        out_shape=jax.ShapeDtypeStruct((B, C, HW), x.dtype),
        grid=(B,),
        in_specs=[
            pl.BlockSpec((None, C, HW), lambda b: (b, 0, 0)),        # x (per sample)
            pl.BlockSpec((None, 4 * C, 1), lambda b: (b, 0, 0)),     # FiLM scalars
            pl.BlockSpec((9, C, C), lambda b: (0, 0, 0)),            # conv1 taps
            pl.BlockSpec((9, C, C), lambda b: (0, 0, 0)),            # conv2 taps
            pl.BlockSpec((2 * C, 1), lambda b: (0, 0)),              # biases
            pl.BlockSpec((2, HW), lambda b: (0, 0)),                 # column masks
        ],
        out_specs=pl.BlockSpec((None, C, HW), lambda b: (b, 0, 0)),
        scratch_shapes=[pltpu.VMEM((C, pad_len), jnp.float32),
                        pltpu.VMEM((C, pad_len), jnp.float32)],
        compiler_params=pltpu.CompilerParams(
            dimension_semantics=("parallel",),
            vmem_limit_bytes=vmem_limit),
    )(x_flat, film, w1, w2, b12, masks)

    return out_flat.reshape(B, C, H, W)


# ----------------------------------------------------------------------------
# Deterministic parameter init (PyTorch-native layouts)
# ----------------------------------------------------------------------------
def init_params(key, C, A, k=3):
    keys = jax.random.split(key, 8)
    conv_scale = 1.0 / float(jnp.sqrt(C * k * k))
    lin_scale = 1.0 / float(jnp.sqrt(A))

    def u(kk, shape, scale):
        return jax.random.uniform(kk, shape, jnp.float32, -scale, scale)

    return dict(
        # nn.Conv2d: weight (Cout, Cin, kH, kW), bias (Cout,)
        w1=u(keys[0], (C, C, k, k), conv_scale), b1=u(keys[1], (C,), conv_scale),
        w2=u(keys[2], (C, C, k, k), conv_scale), b2=u(keys[3], (C,), conv_scale),
        # FiLM linears of the conditional instance norms (gamma ~ 1, beta ~ 0)
        g1w=u(keys[4], (C, A), lin_scale), g1b=jnp.ones((C,), jnp.float32),
        be1w=u(keys[5], (C, A), lin_scale), be1b=jnp.zeros((C,), jnp.float32),
        g2w=u(keys[6], (C, A), lin_scale), g2b=jnp.ones((C,), jnp.float32),
        be2w=u(keys[7], (C, A), lin_scale), be2b=jnp.zeros((C,), jnp.float32),
    )


# ----------------------------------------------------------------------------
# Pure-JAX reference (PyTorch semantics) for the correctness check
# ----------------------------------------------------------------------------
def reference_forward(x, angles, params):
    def conv(h, w, b):
        y = jax.lax.conv_general_dilated(
            h, w, window_strides=(1, 1), padding="SAME",
            dimension_numbers=("NCHW", "OIHW", "NCHW"))
        return y + b.reshape(1, -1, 1, 1)

    def cin(h, gw, gb, bw, bb):
        mean = h.mean(axis=(2, 3), keepdims=True)
        var = ((h - mean) ** 2).mean(axis=(2, 3), keepdims=True)
        hn = (h - mean) / jnp.sqrt(var + EPS)
        gamma = angles @ gw.T + gb.reshape(1, -1)
        beta = angles @ bw.T + bb.reshape(1, -1)
        return gamma[:, :, None, None] * hn + beta[:, :, None, None]

    h = jax.nn.relu(cin(conv(x, params["w1"], params["b1"]),
                        params["g1w"], params["g1b"],
                        params["be1w"], params["be1b"]))
    h = cin(conv(h, params["w2"], params["b2"]),
            params["g2w"], params["g2b"], params["be2w"], params["be2b"])
    return jax.nn.relu(h + x)


if __name__ == "__main__":
    B, C, H, W, A = 2, 4, 16, 16, 4
    key = jax.random.PRNGKey(0)
    kx, ka, kp = jax.random.split(key, 3)
    x = jax.random.normal(kx, (B, C, H, W), jnp.float32)
    angles = jax.random.normal(ka, (B, A), jnp.float32)
    params = init_params(kp, C, A)

    out = jax.block_until_ready(residual_block_forward(x, angles, params))
    ref = reference_forward(x, angles, params)

    assert out.shape == (B, C, H, W)
    if not jnp.allclose(out, ref, atol=1e-3, rtol=1e-3):
        raise AssertionError("Pallas kernel output mismatch vs JAX reference")
    print("KERNEL_OK")
</pallas_src>

<mosaic_0001>
module attributes {stable_mosaic.version = 11 : i64} {
  func.func @_residual_block_kernel(%arg0: i32, %arg1: memref<1x4x256xf32, #tpu.memory_space<vmem>>, %arg2: memref<1x16x1xf32, #tpu.memory_space<vmem>>, %arg3: memref<9x4x4xf32, #tpu.memory_space<vmem>>, %arg4: memref<9x4x4xf32, #tpu.memory_space<vmem>>, %arg5: memref<8x1xf32, #tpu.memory_space<vmem>>, %arg6: memref<2x256xf32, #tpu.memory_space<vmem>>, %arg7: memref<1x4x256xf32, #tpu.memory_space<vmem>>, %arg8: memref<4x512xf32, #tpu.memory_space<vmem>>, %arg9: memref<4x512xf32, #tpu.memory_space<vmem>>) attributes {dimension_semantics = [#tpu.dimension_semantics<parallel>], iteration_bounds = array<i64: 2>, scalar_prefetch = 0 : i64, scratch_operands = 2 : i64, tpu.core_type = #tpu.core_type<tc>, window_params = [{transform_indices = @transform_0, window_bounds = array<i64: 1, 4, 256>}, {transform_indices = @transform_1, window_bounds = array<i64: 1, 16, 1>}, {pipeline_mode = #tpu.pipeline_mode<synchronous>, transform_indices = @transform_2, window_bounds = array<i64: 9, 4, 4>}, {pipeline_mode = #tpu.pipeline_mode<synchronous>, transform_indices = @transform_3, window_bounds = array<i64: 9, 4, 4>}, {pipeline_mode = #tpu.pipeline_mode<synchronous>, transform_indices = @transform_4, window_bounds = array<i64: 8, 1>}, {pipeline_mode = #tpu.pipeline_mode<synchronous>, transform_indices = @transform_5, window_bounds = array<i64: 2, 256>}, {transform_indices = @transform_6, window_bounds = array<i64: 1, 4, 256>}]} {
    %c0 = arith.constant 0 : index
    %c0_0 = arith.constant 0 : index
    %0 = vector.load %arg6[%c0, %c0_0] : memref<2x256xf32, #tpu.memory_space<vmem>>, vector<1x256xf32>
    %c1 = arith.constant 1 : index
    %c0_1 = arith.constant 0 : index
    %1 = vector.load %arg6[%c1, %c0_1] : memref<2x256xf32, #tpu.memory_space<vmem>>, vector<1x256xf32>
    %c0_2 = arith.constant 0 : index
    %c0_3 = arith.constant 0 : index
    %c0_4 = arith.constant 0 : index
    %2 = vector.load %arg1[%c0_2, %c0_3, %c0_4] : memref<1x4x256xf32, #tpu.memory_space<vmem>>, vector<1x4x256xf32>
    %3 = vector.shape_cast %2 : vector<1x4x256xf32> to vector<4x256xf32>
    %cst = arith.constant 0.000000e+00 : f32
    %4 = vector.broadcast %cst : f32 to vector<4x512xf32>
    %c0_5 = arith.constant 0 : index
    %c0_6 = arith.constant 0 : index
    %5 = vector.load %arg8[%c0_5, %c0_6] : memref<4x512xf32, #tpu.memory_space<vmem>>, vector<4x512xf32>
    tpu.vector_store %arg8[%c0_5, %c0_6], %4 {strides = array<i32>} : memref<4x512xf32, #tpu.memory_space<vmem>>, vector<4x512xf32>,
    %c0_7 = arith.constant 0 : index
    %c128 = arith.constant 128 : index
    %6 = vector.load %arg8[%c0_7, %c128] : memref<4x512xf32, #tpu.memory_space<vmem>>, vector<4x256xf32>
    tpu.vector_store %arg8[%c0_7, %c128], %3 {strides = array<i32>} : memref<4x512xf32, #tpu.memory_space<vmem>>, vector<4x256xf32>,
    %c0_8 = arith.constant 0 : index
    %c0_9 = arith.constant 0 : index
    %7 = vector.load %arg5[%c0_8, %c0_9] : memref<8x1xf32, #tpu.memory_space<vmem>>, vector<4x1xf32>
    %c0_10 = arith.constant 0 : index
    %c0_11 = arith.constant 0 : index
    %8 = vector.load %arg8[%c0_10, %c0_11] : memref<4x512xf32, #tpu.memory_space<vmem>>, vector<4x512xf32>
    %cst_12 = arith.constant 0.000000e+00 : f32
    %9 = vector.broadcast %cst_12 : f32 to vector<4x256xf32>
    %10 = vector.extract_strided_slice %8 {offsets = [0, 111], sizes = [4, 256], strides = [1, 1]} : vector<4x512xf32> to vector<4x256xf32>
    %11 = vector.broadcast %0 : vector<1x256xf32> to vector<4x256xf32>
    %12 = arith.mulf %10, %11 : vector<4x256xf32>
    %c0_13 = arith.constant 0 : index
    %c0_14 = arith.constant 0 : index
    %c0_15 = arith.constant 0 : index
    %13 = vector.load %arg3[%c0_13, %c0_14, %c0_15] : memref<9x4x4xf32, #tpu.memory_space<vmem>>, vector<1x4x4xf32>
    %14 = vector.shape_cast %13 : vector<1x4x4xf32> to vector<4x4xf32>
    %cst_16 = arith.constant dense<0.000000e+00> : vector<4x256xf32>
    %15 = tpu.matmul %14, %12, %cst_16 {dimension_numbers = #tpu.dot_dimension_numbers<[1], [0], [0], [1], [0, 0, 1, 1], [], []>} : vector<4x4xf32>, vector<4x256xf32>, vector<4x256xf32> -> vector<4x256xf32>
    %16 = arith.addf %9, %15 : vector<4x256xf32>
    %17 = vector.extract_strided_slice %8 {offsets = [0, 112], sizes = [4, 256], strides = [1, 1]} : vector<4x512xf32> to vector<4x256xf32>
    %c1_17 = arith.constant 1 : index
    %c0_18 = arith.constant 0 : index
    %c0_19 = arith.constant 0 : index
    %18 = vector.load %arg3[%c1_17, %c0_18, %c0_19] : memref<9x4x4xf32, #tpu.memory_space<vmem>>, vector<1x4x4xf32>
    %19 = vector.shape_cast %18 : vector<1x4x4xf32> to vector<4x4xf32>
    %cst_20 = arith.constant dense<0.000000e+00> : vector<4x256xf32>
    %20 = tpu.matmul %19, %17, %cst_20 {dimension_numbers = #tpu.dot_dimension_numbers<[1], [0], [0], [1], [0, 0, 1, 1], [], []>} : vector<4x4xf32>, vector<4x256xf32>, vector<4x256xf32> -> vector<4x256xf32>
    %21 = arith.addf %16, %20 : vector<4x256xf32>
    %22 = vector.extract_strided_slice %8 {offsets = [0, 113], sizes = [4, 256], strides = [1, 1]} : vector<4x512xf32> to vector<4x256xf32>
    %23 = vector.broadcast %1 : vector<1x256xf32> to vector<4x256xf32>
    %24 = arith.mulf %22, %23 : vector<4x256xf32>
    %c2 = arith.constant 2 : index
    %c0_21 = arith.constant 0 : index
    %c0_22 = arith.constant 0 : index
    %25 = vector.load %arg3[%c2, %c0_21, %c0_22] : memref<9x4x4xf32, #tpu.memory_space<vmem>>, vector<1x4x4xf32>
    %26 = vector.shape_cast %25 : vector<1x4x4xf32> to vector<4x4xf32>
    %cst_23 = arith.constant dense<0.000000e+00> : vector<4x256xf32>
    %27 = tpu.matmul %26, %24, %cst_23 {dimension_numbers = #tpu.dot_dimension_numbers<[1], [0], [0], [1], [0, 0, 1, 1], [], []>} : vector<4x4xf32>, vector<4x256xf32>, vector<4x256xf32> -> vector<4x256xf32>
    %28 = arith.addf %21, %27 : vector<4x256xf32>
    %29 = vector.extract_strided_slice %8 {offsets = [0, 127], sizes = [4, 256], strides = [1, 1]} : vector<4x512xf32> to vector<4x256xf32>
    %30 = vector.broadcast %0 : vector<1x256xf32> to vector<4x256xf32>
    %31 = arith.mulf %29, %30 : vector<4x256xf32>
    %c3 = arith.constant 3 : index
    %c0_24 = arith.constant 0 : index
    %c0_25 = arith.constant 0 : index
    %32 = vector.load %arg3[%c3, %c0_24, %c0_25] : memref<9x4x4xf32, #tpu.memory_space<vmem>>, vector<1x4x4xf32>
    %33 = vector.shape_cast %32 : vector<1x4x4xf32> to vector<4x4xf32>
    %cst_26 = arith.constant dense<0.000000e+00> : vector<4x256xf32>
    %34 = tpu.matmul %33, %31, %cst_26 {dimension_numbers = #tpu.dot_dimension_numbers<[1], [0], [0], [1], [0, 0, 1, 1], [], []>} : vector<4x4xf32>, vector<4x256xf32>, vector<4x256xf32> -> vector<4x256xf32>
    %35 = arith.addf %28, %34 : vector<4x256xf32>
    %36 = vector.extract_strided_slice %8 {offsets = [0, 128], sizes = [4, 256], strides = [1, 1]} : vector<4x512xf32> to vector<4x256xf32>
    %c4 = arith.constant 4 : index
    %c0_27 = arith.constant 0 : index
    %c0_28 = arith.constant 0 : index
    %37 = vector.load %arg3[%c4, %c0_27, %c0_28] : memref<9x4x4xf32, #tpu.memory_space<vmem>>, vector<1x4x4xf32>
    %38 = vector.shape_cast %37 : vector<1x4x4xf32> to vector<4x4xf32>
    %cst_29 = arith.constant dense<0.000000e+00> : vector<4x256xf32>
    %39 = tpu.matmul %38, %36, %cst_29 {dimension_numbers = #tpu.dot_dimension_numbers<[1], [0], [0], [1], [0, 0, 1, 1], [], []>} : vector<4x4xf32>, vector<4x256xf32>, vector<4x256xf32> -> vector<4x256xf32>
    %40 = arith.addf %35, %39 : vector<4x256xf32>
    %41 = vector.extract_strided_slice %8 {offsets = [0, 129], sizes = [4, 256], strides = [1, 1]} : vector<4x512xf32> to vector<4x256xf32>
    %42 = vector.broadcast %1 : vector<1x256xf32> to vector<4x256xf32>
    %43 = arith.mulf %41, %42 : vector<4x256xf32>
    %c5 = arith.constant 5 : index
    %c0_30 = arith.constant 0 : index
    %c0_31 = arith.constant 0 : index
    %44 = vector.load %arg3[%c5, %c0_30, %c0_31] : memref<9x4x4xf32, #tpu.memory_space<vmem>>, vector<1x4x4xf32>
    %45 = vector.shape_cast %44 : vector<1x4x4xf32> to vector<4x4xf32>
    %cst_32 = arith.constant dense<0.000000e+00> : vector<4x256xf32>
    %46 = tpu.matmul %45, %43, %cst_32 {dimension_numbers = #tpu.dot_dimension_numbers<[1], [0], [0], [1], [0, 0, 1, 1], [], []>} : vector<4x4xf32>, vector<4x256xf32>, vector<4x256xf32> -> vector<4x256xf32>
    %47 = arith.addf %40, %46 : vector<4x256xf32>
    %48 = vector.extract_strided_slice %8 {offsets = [0, 143], sizes = [4, 256], strides = [1, 1]} : vector<4x512xf32> to vector<4x256xf32>
    %49 = vector.broadcast %0 : vector<1x256xf32> to vector<4x256xf32>
    %50 = arith.mulf %48, %49 : vector<4x256xf32>
    %c6 = arith.constant 6 : index
    %c0_33 = arith.constant 0 : index
    %c0_34 = arith.constant 0 : index
    %51 = vector.load %arg3[%c6, %c0_33, %c0_34] : memref<9x4x4xf32, #tpu.memory_space<vmem>>, vector<1x4x4xf32>
    %52 = vector.shape_cast %51 : vector<1x4x4xf32> to vector<4x4xf32>
    %cst_35 = arith.constant dense<0.000000e+00> : vector<4x256xf32>
    %53 = tpu.matmul %52, %50, %cst_35 {dimension_numbers = #tpu.dot_dimension_numbers<[1], [0], [0], [1], [0, 0, 1, 1], [], []>} : vector<4x4xf32>, vector<4x256xf32>, vector<4x256xf32> -> vector<4x256xf32>
    %54 = arith.addf %47, %53 : vector<4x256xf32>
    %55 = vector.extract_strided_slice %8 {offsets = [0, 144], sizes = [4, 256], strides = [1, 1]} : vector<4x512xf32> to vector<4x256xf32>
    %c7 = arith.constant 7 : index
    %c0_36 = arith.constant 0 : index
    %c0_37 = arith.constant 0 : index
    %56 = vector.load %arg3[%c7, %c0_36, %c0_37] : memref<9x4x4xf32, #tpu.memory_space<vmem>>, vector<1x4x4xf32>
    %57 = vector.shape_cast %56 : vector<1x4x4xf32> to vector<4x4xf32>
    %cst_38 = arith.constant dense<0.000000e+00> : vector<4x256xf32>
    %58 = tpu.matmul %57, %55, %cst_38 {dimension_numbers = #tpu.dot_dimension_numbers<[1], [0], [0], [1], [0, 0, 1, 1], [], []>} : vector<4x4xf32>, vector<4x256xf32>, vector<4x256xf32> -> vector<4x256xf32>
    %59 = arith.addf %54, %58 : vector<4x256xf32>
    %60 = vector.extract_strided_slice %8 {offsets = [0, 145], sizes = [4, 256], strides = [1, 1]} : vector<4x512xf32> to vector<4x256xf32>
    %61 = vector.broadcast %1 : vector<1x256xf32> to vector<4x256xf32>
    %62 = arith.mulf %60, %61 : vector<4x256xf32>
    %c8 = arith.constant 8 : index
    %c0_39 = arith.constant 0 : index
    %c0_40 = arith.constant 0 : index
    %63 = vector.load %arg3[%c8, %c0_39, %c0_40] : memref<9x4x4xf32, #tpu.memory_space<vmem>>, vector<1x4x4xf32>
    %64 = vector.shape_cast %63 : vector<1x4x4xf32> to vector<4x4xf32>
    %cst_41 = arith.constant dense<0.000000e+00> : vector<4x256xf32>
    %65 = tpu.matmul %64, %62, %cst_41 {dimension_numbers = #tpu.dot_dimension_numbers<[1], [0], [0], [1], [0, 0, 1, 1], [], []>} : vector<4x4xf32>, vector<4x256xf32>, vector<4x256xf32> -> vector<4x256xf32>
    %66 = arith.addf %59, %65 : vector<4x256xf32>
    %67 = vector.broadcast %7 : vector<4x1xf32> to vector<4x256xf32>
    %68 = arith.addf %66, %67 : vector<4x256xf32>
    %c0_42 = arith.constant 0 : index
    %c0_43 = arith.constant 0 : index
    %c0_44 = arith.constant 0 : index
    %69 = vector.load %arg2[%c0_42, %c0_43, %c0_44] : memref<1x16x1xf32, #tpu.memory_space<vmem>>, vector<1x4x1xf32>
    %70 = vector.shape_cast %69 : vector<1x4x1xf32> to vector<4x1xf32>
    %c0_45 = arith.constant 0 : index
    %c4_46 = arith.constant 4 : index
    %c0_47 = arith.constant 0 : index
    %71 = vector.load %arg2[%c0_45, %c4_46, %c0_47] : memref<1x16x1xf32, #tpu.memory_space<vmem>>, vector<1x4x1xf32>
    %72 = vector.shape_cast %71 : vector<1x4x1xf32> to vector<4x1xf32>
    %cst_48 = arith.constant dense<0.000000e+00> : vector<4xf32>
    %73 = vector.multi_reduction <add>, %68, %cst_48 [1] : vector<4x256xf32> to vector<4xf32>
    %74 = vector.shape_cast %73 : vector<4xf32> to vector<4x1xf32>
    %cst_49 = arith.constant 2.560000e+02 : f32
    %75 = vector.broadcast %cst_49 : f32 to vector<4x1xf32>
    %76 = arith.divf %74, %75 : vector<4x1xf32>
    %77 = vector.broadcast %76 : vector<4x1xf32> to vector<4x256xf32>
    %78 = arith.subf %68, %77 : vector<4x256xf32>
    %79 = arith.mulf %78, %78 : vector<4x256xf32>
    %cst_50 = arith.constant dense<0.000000e+00> : vector<4xf32>
    %80 = vector.multi_reduction <add>, %79, %cst_50 [1] : vector<4x256xf32> to vector<4xf32>
    %81 = vector.shape_cast %80 : vector<4xf32> to vector<4x1xf32>
    %cst_51 = arith.constant 2.560000e+02 : f32
    %82 = vector.broadcast %cst_51 : f32 to vector<4x1xf32>
    %83 = arith.divf %81, %82 : vector<4x1xf32>
    %cst_52 = arith.constant 9.99999974E-6 : f32
    %84 = vector.broadcast %cst_52 : f32 to vector<4x1xf32>
    %85 = arith.addf %83, %84 : vector<4x1xf32>
    %86 = math.rsqrt %85 : vector<4x1xf32>
    %87 = vector.broadcast %86 : vector<4x1xf32> to vector<4x256xf32>
    %88 = arith.mulf %78, %87 : vector<4x256xf32>
    %89 = vector.broadcast %70 : vector<4x1xf32> to vector<4x256xf32>
    %90 = arith.mulf %89, %88 : vector<4x256xf32>
    %91 = vector.broadcast %72 : vector<4x1xf32> to vector<4x256xf32>
    %92 = arith.addf %90, %91 : vector<4x256xf32>
    %cst_53 = arith.constant 0.000000e+00 : f32
    %93 = vector.broadcast %cst_53 : f32 to vector<4x256xf32>
    %94 = arith.maximumf %92, %93 : vector<4x256xf32>
    %cst_54 = arith.constant 0.000000e+00 : f32
    %95 = vector.broadcast %cst_54 : f32 to vector<4x512xf32>
    %c0_55 = arith.constant 0 : index
    %c0_56 = arith.constant 0 : index
    %96 = vector.load %arg9[%c0_55, %c0_56] : memref<4x512xf32, #tpu.memory_space<vmem>>, vector<4x512xf32>
    tpu.vector_store %arg9[%c0_55, %c0_56], %95 {strides = array<i32>} : memref<4x512xf32, #tpu.memory_space<vmem>>, vector<4x512xf32>,
    %c0_57 = arith.constant 0 : index
    %c128_58 = arith.constant 128 : index
    %97 = vector.load %arg9[%c0_57, %c128_58] : memref<4x512xf32, #tpu.memory_space<vmem>>, vector<4x256xf32>
    tpu.vector_store %arg9[%c0_57, %c128_58], %94 {strides = array<i32>} : memref<4x512xf32, #tpu.memory_space<vmem>>, vector<4x256xf32>,
    %c4_59 = arith.constant 4 : index
    %c0_60 = arith.constant 0 : index
    %98 = vector.load %arg5[%c4_59, %c0_60] : memref<8x1xf32, #tpu.memory_space<vmem>>, vector<4x1xf32>
    %c0_61 = arith.constant 0 : index
    %c0_62 = arith.constant 0 : index
    %99 = vector.load %arg9[%c0_61, %c0_62] : memref<4x512xf32, #tpu.memory_space<vmem>>, vector<4x512xf32>
    %cst_63 = arith.constant 0.000000e+00 : f32
    %100 = vector.broadcast %cst_63 : f32 to vector<4x256xf32>
    %101 = vector.extract_strided_slice %99 {offsets = [0, 111], sizes = [4, 256], strides = [1, 1]} : vector<4x512xf32> to vector<4x256xf32>
    %102 = vector.broadcast %0 : vector<1x256xf32> to vector<4x256xf32>
    %103 = arith.mulf %101, %102 : vector<4x256xf32>
    %c0_64 = arith.constant 0 : index
    %c0_65 = arith.constant 0 : index
    %c0_66 = arith.constant 0 : index
    %104 = vector.load %arg4[%c0_64, %c0_65, %c0_66] : memref<9x4x4xf32, #tpu.memory_space<vmem>>, vector<1x4x4xf32>
    %105 = vector.shape_cast %104 : vector<1x4x4xf32> to vector<4x4xf32>
    %cst_67 = arith.constant dense<0.000000e+00> : vector<4x256xf32>
    %106 = tpu.matmul %105, %103, %cst_67 {dimension_numbers = #tpu.dot_dimension_numbers<[1], [0], [0], [1], [0, 0, 1, 1], [], []>} : vector<4x4xf32>, vector<4x256xf32>, vector<4x256xf32> -> vector<4x256xf32>
    %107 = arith.addf %100, %106 : vector<4x256xf32>
    %108 = vector.extract_strided_slice %99 {offsets = [0, 112], sizes = [4, 256], strides = [1, 1]} : vector<4x512xf32> to vector<4x256xf32>
    %c1_68 = arith.constant 1 : index
    %c0_69 = arith.constant 0 : index
    %c0_70 = arith.constant 0 : index
    %109 = vector.load %arg4[%c1_68, %c0_69, %c0_70] : memref<9x4x4xf32, #tpu.memory_space<vmem>>, vector<1x4x4xf32>
    %110 = vector.shape_cast %109 : vector<1x4x4xf32> to vector<4x4xf32>
    %cst_71 = arith.constant dense<0.000000e+00> : vector<4x256xf32>
    %111 = tpu.matmul %110, %108, %cst_71 {dimension_numbers = #tpu.dot_dimension_numbers<[1], [0], [0], [1], [0, 0, 1, 1], [], []>} : vector<4x4xf32>, vector<4x256xf32>, vector<4x256xf32> -> vector<4x256xf32>
    %112 = arith.addf %107, %111 : vector<4x256xf32>
    %113 = vector.extract_strided_slice %99 {offsets = [0, 113], sizes = [4, 256], strides = [1, 1]} : vector<4x512xf32> to vector<4x256xf32>
    %114 = vector.broadcast %1 : vector<1x256xf32> to vector<4x256xf32>
    %115 = arith.mulf %113, %114 : vector<4x256xf32>
    %c2_72 = arith.constant 2 : index
    %c0_73 = arith.constant 0 : index
    %c0_74 = arith.constant 0 : index
    %116 = vector.load %arg4[%c2_72, %c0_73, %c0_74] : memref<9x4x4xf32, #tpu.memory_space<vmem>>, vector<1x4x4xf32>
    %117 = vector.shape_cast %116 : vector<1x4x4xf32> to vector<4x4xf32>
    %cst_75 = arith.constant dense<0.000000e+00> : vector<4x256xf32>
    %118 = tpu.matmul %117, %115, %cst_75 {dimension_numbers = #tpu.dot_dimension_numbers<[1], [0], [0], [1], [0, 0, 1, 1], [], []>} : vector<4x4xf32>, vector<4x256xf32>, vector<4x256xf32> -> vector<4x256xf32>
    %119 = arith.addf %112, %118 : vector<4x256xf32>
    %120 = vector.extract_strided_slice %99 {offsets = [0, 127], sizes = [4, 256], strides = [1, 1]} : vector<4x512xf32> to vector<4x256xf32>
    %121 = vector.broadcast %0 : vector<1x256xf32> to vector<4x256xf32>
    %122 = arith.mulf %120, %121 : vector<4x256xf32>
    %c3_76 = arith.constant 3 : index
    %c0_77 = arith.constant 0 : index
    %c0_78 = arith.constant 0 : index
    %123 = vector.load %arg4[%c3_76, %c0_77, %c0_78] : memref<9x4x4xf32, #tpu.memory_space<vmem>>, vector<1x4x4xf32>
    %124 = vector.shape_cast %123 : vector<1x4x4xf32> to vector<4x4xf32>
    %cst_79 = arith.constant dense<0.000000e+00> : vector<4x256xf32>
    %125 = tpu.matmul %124, %122, %cst_79 {dimension_numbers = #tpu.dot_dimension_numbers<[1], [0], [0], [1], [0, 0, 1, 1], [], []>} : vector<4x4xf32>, vector<4x256xf32>, vector<4x256xf32> -> vector<4x256xf32>
    %126 = arith.addf %119, %125 : vector<4x256xf32>
    %127 = vector.extract_strided_slice %99 {offsets = [0, 128], sizes = [4, 256], strides = [1, 1]} : vector<4x512xf32> to vector<4x256xf32>
    %c4_80 = arith.constant 4 : index
    %c0_81 = arith.constant 0 : index
    %c0_82 = arith.constant 0 : index
    %128 = vector.load %arg4[%c4_80, %c0_81, %c0_82] : memref<9x4x4xf32, #tpu.memory_space<vmem>>, vector<1x4x4xf32>
    %129 = vector.shape_cast %128 : vector<1x4x4xf32> to vector<4x4xf32>
    %cst_83 = arith.constant dense<0.000000e+00> : vector<4x256xf32>
    %130 = tpu.matmul %129, %127, %cst_83 {dimension_numbers = #tpu.dot_dimension_numbers<[1], [0], [0], [1], [0, 0, 1, 1], [], []>} : vector<4x4xf32>, vector<4x256xf32>, vector<4x256xf32> -> vector<4x256xf32>
    %131 = arith.addf %126, %130 : vector<4x256xf32>
    %132 = vector.extract_strided_slice %99 {offsets = [0, 129], sizes = [4, 256], strides = [1, 1]} : vector<4x512xf32> to vector<4x256xf32>
    %133 = vector.broadcast %1 : vector<1x256xf32> to vector<4x256xf32>
    %134 = arith.mulf %132, %133 : vector<4x256xf32>
    %c5_84 = arith.constant 5 : index
    %c0_85 = arith.constant 0 : index
    %c0_86 = arith.constant 0 : index
    %135 = vector.load %arg4[%c5_84, %c0_85, %c0_86] : memref<9x4x4xf32, #tpu.memory_space<vmem>>, vector<1x4x4xf32>
    %136 = vector.shape_cast %135 : vector<1x4x4xf32> to vector<4x4xf32>
    %cst_87 = arith.constant dense<0.000000e+00> : vector<4x256xf32>
    %137 = tpu.matmul %136, %134, %cst_87 {dimension_numbers = #tpu.dot_dimension_numbers<[1], [0], [0], [1], [0, 0, 1, 1], [], []>} : vector<4x4xf32>, vector<4x256xf32>, vector<4x256xf32> -> vector<4x256xf32>
    %138 = arith.addf %131, %137 : vector<4x256xf32>
    %139 = vector.extract_strided_slice %99 {offsets = [0, 143], sizes = [4, 256], strides = [1, 1]} : vector<4x512xf32> to vector<4x256xf32>
    %140 = vector.broadcast %0 : vector<1x256xf32> to vector<4x256xf32>
    %141 = arith.mulf %139, %140 : vector<4x256xf32>
    %c6_88 = arith.constant 6 : index
    %c0_89 = arith.constant 0 : index
    %c0_90 = arith.constant 0 : index
    %142 = vector.load %arg4[%c6_88, %c0_89, %c0_90] : memref<9x4x4xf32, #tpu.memory_space<vmem>>, vector<1x4x4xf32>
    %143 = vector.shape_cast %142 : vector<1x4x4xf32> to vector<4x4xf32>
    %cst_91 = arith.constant dense<0.000000e+00> : vector<4x256xf32>
    %144 = tpu.matmul %143, %141, %cst_91 {dimension_numbers = #tpu.dot_dimension_numbers<[1], [0], [0], [1], [0, 0, 1, 1], [], []>} : vector<4x4xf32>, vector<4x256xf32>, vector<4x256xf32> -> vector<4x256xf32>
    %145 = arith.addf %138, %144 : vector<4x256xf32>
    %146 = vector.extract_strided_slice %99 {offsets = [0, 144], sizes = [4, 256], strides = [1, 1]} : vector<4x512xf32> to vector<4x256xf32>
    %c7_92 = arith.constant 7 : index
    %c0_93 = arith.constant 0 : index
    %c0_94 = arith.constant 0 : index
    %147 = vector.load %arg4[%c7_92, %c0_93, %c0_94] : memref<9x4x4xf32, #tpu.memory_space<vmem>>, vector<1x4x4xf32>
    %148 = vector.shape_cast %147 : vector<1x4x4xf32> to vector<4x4xf32>
    %cst_95 = arith.constant dense<0.000000e+00> : vector<4x256xf32>
    %149 = tpu.matmul %148, %146, %cst_95 {dimension_numbers = #tpu.dot_dimension_numbers<[1], [0], [0], [1], [0, 0, 1, 1], [], []>} : vector<4x4xf32>, vector<4x256xf32>, vector<4x256xf32> -> vector<4x256xf32>
    %150 = arith.addf %145, %149 : vector<4x256xf32>
    %151 = vector.extract_strided_slice %99 {offsets = [0, 145], sizes = [4, 256], strides = [1, 1]} : vector<4x512xf32> to vector<4x256xf32>
    %152 = vector.broadcast %1 : vector<1x256xf32> to vector<4x256xf32>
    %153 = arith.mulf %151, %152 : vector<4x256xf32>
    %c8_96 = arith.constant 8 : index
    %c0_97 = arith.constant 0 : index
    %c0_98 = arith.constant 0 : index
    %154 = vector.load %arg4[%c8_96, %c0_97, %c0_98] : memref<9x4x4xf32, #tpu.memory_space<vmem>>, vector<1x4x4xf32>
    %155 = vector.shape_cast %154 : vector<1x4x4xf32> to vector<4x4xf32>
    %cst_99 = arith.constant dense<0.000000e+00> : vector<4x256xf32>
    %156 = tpu.matmul %155, %153, %cst_99 {dimension_numbers = #tpu.dot_dimension_numbers<[1], [0], [0], [1], [0, 0, 1, 1], [], []>} : vector<4x4xf32>, vector<4x256xf32>, vector<4x256xf32> -> vector<4x256xf32>
    %157 = arith.addf %150, %156 : vector<4x256xf32>
    %158 = vector.broadcast %98 : vector<4x1xf32> to vector<4x256xf32>
    %159 = arith.addf %157, %158 : vector<4x256xf32>
    %c0_100 = arith.constant 0 : index
    %c8_101 = arith.constant 8 : index
    %c0_102 = arith.constant 0 : index
    %160 = vector.load %arg2[%c0_100, %c8_101, %c0_102] : memref<1x16x1xf32, #tpu.memory_space<vmem>>, vector<1x4x1xf32>
    %161 = vector.shape_cast %160 : vector<1x4x1xf32> to vector<4x1xf32>
    %c0_103 = arith.constant 0 : index
    %c12 = arith.constant 12 : index
    %c0_104 = arith.constant 0 : index
    %162 = vector.load %arg2[%c0_103, %c12, %c0_104] : memref<1x16x1xf32, #tpu.memory_space<vmem>>, vector<1x4x1xf32>
    %163 = vector.shape_cast %162 : vector<1x4x1xf32> to vector<4x1xf32>
    %cst_105 = arith.constant dense<0.000000e+00> : vector<4xf32>
    %164 = vector.multi_reduction <add>, %159, %cst_105 [1] : vector<4x256xf32> to vector<4xf32>
    %165 = vector.shape_cast %164 : vector<4xf32> to vector<4x1xf32>
    %cst_106 = arith.constant 2.560000e+02 : f32
    %166 = vector.broadcast %cst_106 : f32 to vector<4x1xf32>
    %167 = arith.divf %165, %166 : vector<4x1xf32>
    %168 = vector.broadcast %167 : vector<4x1xf32> to vector<4x256xf32>
    %169 = arith.subf %159, %168 : vector<4x256xf32>
    %170 = arith.mulf %169, %169 : vector<4x256xf32>
    %cst_107 = arith.constant dense<0.000000e+00> : vector<4xf32>
    %171 = vector.multi_reduction <add>, %170, %cst_107 [1] : vector<4x256xf32> to vector<4xf32>
    %172 = vector.shape_cast %171 : vector<4xf32> to vector<4x1xf32>
    %cst_108 = arith.constant 2.560000e+02 : f32
    %173 = vector.broadcast %cst_108 : f32 to vector<4x1xf32>
    %174 = arith.divf %172, %173 : vector<4x1xf32>
    %cst_109 = arith.constant 9.99999974E-6 : f32
    %175 = vector.broadcast %cst_109 : f32 to vector<4x1xf32>
    %176 = arith.addf %174, %175 : vector<4x1xf32>
    %177 = math.rsqrt %176 : vector<4x1xf32>
    %178 = vector.broadcast %177 : vector<4x1xf32> to vector<4x256xf32>
    %179 = arith.mulf %169, %178 : vector<4x256xf32>
    %180 = vector.broadcast %161 : vector<4x1xf32> to vector<4x256xf32>
    %181 = arith.mulf %180, %179 : vector<4x256xf32>
    %182 = vector.broadcast %163 : vector<4x1xf32> to vector<4x256xf32>
    %183 = arith.addf %181, %182 : vector<4x256xf32>
    %184 = arith.addf %183, %3 : vector<4x256xf32>
    %cst_110 = arith.constant 0.000000e+00 : f32
    %185 = vector.broadcast %cst_110 : f32 to vector<4x256xf32>
    %186 = arith.maximumf %184, %185 : vector<4x256xf32>
    %c0_111 = arith.constant 0 : index
    %c0_112 = arith.constant 0 : index
    %c0_113 = arith.constant 0 : index
    %187 = vector.load %arg7[%c0_111, %c0_112, %c0_113] : memref<1x4x256xf32, #tpu.memory_space<vmem>>, vector<1x4x256xf32>
    %188 = vector.shape_cast %187 : vector<1x4x256xf32> to vector<4x256xf32>
    %189 = vector.shape_cast %186 : vector<4x256xf32> to vector<1x4x256xf32>
    tpu.vector_store %arg7[%c0_111, %c0_112, %c0_113], %189 {strides = array<i32>} : memref<1x4x256xf32, #tpu.memory_space<vmem>>, vector<1x4x256xf32>,
    return
  }
  func.func @transform_0(%arg0: i32) -> (i32, i32, i32) {
    %c0_i32 = arith.constant 0 : i32
    %c0_i32_0 = arith.constant 0 : i32
    %c0_i32_1 = arith.constant 0 : i32
    return %arg0, %c0_i32, %c0_i32_0 : i32, i32, i32
  }
  func.func @transform_1(%arg0: i32) -> (i32, i32, i32) {
    %c0_i32 = arith.constant 0 : i32
    %c0_i32_0 = arith.constant 0 : i32
    %c0_i32_1 = arith.constant 0 : i32
    return %arg0, %c0_i32, %c0_i32_0 : i32, i32, i32
  }
  func.func @transform_2(%arg0: i32) -> (i32, i32, i32) {
    %c0_i32 = arith.constant 0 : i32
    %c0_i32_0 = arith.constant 0 : i32
    %c0_i32_1 = arith.constant 0 : i32
    %c0_i32_2 = arith.constant 0 : i32
    return %c0_i32, %c0_i32_0, %c0_i32_1 : i32, i32, i32
  }
  func.func @transform_3(%arg0: i32) -> (i32, i32, i32) {
    %c0_i32 = arith.constant 0 : i32
    %c0_i32_0 = arith.constant 0 : i32
    %c0_i32_1 = arith.constant 0 : i32
    %c0_i32_2 = arith.constant 0 : i32
    return %c0_i32, %c0_i32_0, %c0_i32_1 : i32, i32, i32
  }
  func.func @transform_4(%arg0: i32) -> (i32, i32) {
    %c0_i32 = arith.constant 0 : i32
    %c0_i32_0 = arith.constant 0 : i32
    %c0_i32_1 = arith.constant 0 : i32
    return %c0_i32, %c0_i32_0 : i32, i32
  }
  func.func @transform_5(%arg0: i32) -> (i32, i32) {
    %c0_i32 = arith.constant 0 : i32
    %c0_i32_0 = arith.constant 0 : i32
    %c0_i32_1 = arith.constant 0 : i32
    return %c0_i32, %c0_i32_0 : i32, i32
  }
  func.func @transform_6(%arg0: i32) -> (i32, i32, i32) {
    %c0_i32 = arith.constant 0 : i32
    %c0_i32_0 = arith.constant 0 : i32
    %c0_i32_1 = arith.constant 0 : i32
    return %arg0, %c0_i32, %c0_i32_0 : i32, i32, i32
  }
}

</mosaic_0001>

<llo_original>
// kernel: tpu_custom_call.1
$region0: #{tpu_custom_call.1}
  #allocation0 [shape = 'u32[]', space=smem, size = 0x4, offset = 0x4, fixed_abs, tag = 'smem constant byte address 0x4 - core index']
  #allocation1 [shape = 'u32[144,128]{1,0:T(1,128)}', space=vmem, size = 0x12000, scoped, tag = 'internal scratch']
  #allocation2 [shape = 'f32[4,512]{1,0:T(4,128)}', space=vmem, size = 0x2000, scoped, tag = 'scratch operand']
  #allocation3 [shape = 'f32[4,512]{1,0:T(4,128)}', space=vmem, size = 0x2000, scoped, tag = 'scratch operand']
  %s0 = inlined_call_operand.vmem [shape: f32[2,4,256], index: 0, kind: input, shape index: {}]
  %s1 = inlined_call_operand.vmem [shape: f32[2,16,1], index: 1, kind: input, shape index: {}]
  %s2 = inlined_call_operand.vmem [shape: f32[9,4,4], index: 2, kind: input, shape index: {}]
  %s3 = inlined_call_operand.vmem [shape: f32[9,4,4], index: 3, kind: input, shape index: {}]
  %s4 = inlined_call_operand.vmem [shape: f32[8,1], index: 4, kind: input, shape index: {}]
  %s5 = inlined_call_operand.vmem [shape: f32[2,256], index: 5, kind: input, shape index: {}]
  %s6 = inlined_call_operand.hbm [shape: f32[2,4,256], index: 6, kind: output, shape index: {}]
  %s7 = sld [smem:[#allocation0]]
  $region57: #{tpu_custom_call.1} parent=0
    _
  %s9 = ssub.s32 1, %s7
  %s10 = scalar_select 0, %s9, %s7
  $region1: #{tpu_custom_call.1} parent=0
    #allocation4 [shape = 'u8[8192]{0}', space=vmem, size = 0x2000, scoped, tag = 'output window, operand 0']
    #allocation5 [shape = 's32[2]{0}', space=sflag, size = 0x8, scoped, tag = 'scoped memory for tpu_custom_call.1']
    %11 = vsyncpa [#allocation5], 0
    %s12 = scalar_lea.sflag [#allocation5], 1
    %13 = vsyncpa %s12, 0
    loop: start=0, step=1, limit=4
    $region2: #{tpu_custom_call.1} parent=1 // loop_pre_header
      _
    $region3: #{tpu_custom_call.1} parent=1 // loop_header
      %s15 = sphi 0, %s19
      %p16 = scmp.ge.s32.totalorder %s15, 4
      %s25 = sphi 0, %s27
      %s28 = sphi 0, %s25
      %s29 = sphi 0, %s28
      %s45 = sphi 0, %s29
      %s51 = sphi 0, %s53
      %s54 = sphi 0, %s51
      %s55 = sphi 0, %s54
      %s71 = sphi 0, %s55
      %s75 = sphi 0, %s75
      %s77 = sphi 0, %s75
      %s78 = sphi 0, %s77
      %s92 = sphi 0, %s78
      %s96 = sphi 0, %s96
      %s98 = sphi 0, %s96
      %s99 = sphi 0, %s98
      %s113 = sphi 0, %s99
      %s117 = sphi 0, %s117
      %s119 = sphi 0, %s117
      %s120 = sphi 0, %s119
      %s134 = sphi 0, %s120
      %s138 = sphi 0, %s138
      %s140 = sphi 0, %s138
      %s141 = sphi 0, %s140
      %s155 = sphi 0, %s141
      %s161 = sphi 0, %s163
      %s164 = sphi 0, %s161
      %s165 = sphi 0, %s164
      %s181 = sphi 0, %s165
    $region4: #{tpu_custom_call.1} parent=1 // loop_header_branch
      %18 = sbr.rel (%p16) target = $region8
    $region5: #{tpu_custom_call.1} parent=1 // loop_body
      %s20 = ssub.s32 %s15, 1
      %s21 = ssub.s32 %s15, 2
      %s22 = sadd.s32 %s15, 1
      %s23 = ssub.s32 %s15, %s22
      %p24 = scmp.eq.s32.totalorder %s23, 0
      %s26 = sadd.s32 %s25, 1
      %s27 = scalar_select %p24, %s25, %s26
      %p30 = pneg %p24
      %p31 = scmp.eq.s32.totalorder %s15, 1
      %p32 = por %p30, %p31
      %p33 = scmp.ne.s32.totalorder %s25, %s28
      %p34 = scmp.eq.s32.totalorder %s15, 0
      %p35 = por %p33, %p34
      %p36 = scmp.ne.s32.totalorder %s25, %s28
      %p37 = scmp.eq.s32.totalorder %s20, 1
      %p38 = por %p36, %p37
      %p39 = scmp.ne.s32.totalorder %s28, %s29
      %p40 = scmp.eq.s32.totalorder %s20, 0
      %p41 = por %p39, %p40
      %p42 = scmp.ne.s32.totalorder %s28, %s29
      %p43 = scmp.eq.s32.totalorder %s21, 1
      %p44 = por %p42, %p43
      %p46 = scmp.ne.s32.totalorder %s29, %s45
      %p47 = scmp.eq.s32.totalorder %s21, 0
      %p48 = por %p46, %p47
      %s49 = ssub.s32 %s15, %s22
      %p50 = scmp.eq.s32.totalorder %s49, 0
      %s52 = sadd.s32 %s51, 1
      %s53 = scalar_select %p50, %s51, %s52
      %p56 = pneg %p50
      %p57 = scmp.eq.s32.totalorder %s15, 1
      %p58 = por %p56, %p57
      %p59 = scmp.ne.s32.totalorder %s51, %s54
      %p60 = scmp.eq.s32.totalorder %s15, 0
      %p61 = por %p59, %p60
      %p62 = scmp.ne.s32.totalorder %s51, %s54
      %p63 = scmp.eq.s32.totalorder %s20, 1
      %p64 = por %p62, %p63
      %p65 = scmp.ne.s32.totalorder %s54, %s55
      %p66 = scmp.eq.s32.totalorder %s20, 0
      %p67 = por %p65, %p66
      %p68 = scmp.ne.s32.totalorder %s54, %s55
      %p69 = scmp.eq.s32.totalorder %s21, 1
      %p70 = por %p68, %p69
      %p72 = scmp.ne.s32.totalorder %s55, %s71
      %p73 = scmp.eq.s32.totalorder %s21, 0
      %p74 = por %p72, %p73
      %s76 = sadd.s32 %s75, 1
      %p79 = scmp.eq.s32.totalorder %s15, 1
      %p80 = scmp.ne.s32.totalorder %s75, %s77
      %p81 = scmp.eq.s32.totalorder %s15, 0
      %p82 = por %p80, %p81
      %p83 = scmp.ne.s32.totalorder %s75, %s77
      %p84 = scmp.eq.s32.totalorder %s20, 1
      %p85 = por %p83, %p84
      %p86 = scmp.ne.s32.totalorder %s77, %s78
      %p87 = scmp.eq.s32.totalorder %s20, 0
      %p88 = por %p86, %p87
      %p89 = scmp.ne.s32.totalorder %s77, %s78
      %p90 = scmp.eq.s32.totalorder %s21, 1
      %p91 = por %p89, %p90
      %p93 = scmp.ne.s32.totalorder %s78, %s92
      %p94 = scmp.eq.s32.totalorder %s21, 0
      %p95 = por %p93, %p94
      %s97 = sadd.s32 %s96, 1
      %p100 = scmp.eq.s32.totalorder %s15, 1
      %p101 = scmp.ne.s32.totalorder %s96, %s98
      %p102 = scmp.eq.s32.totalorder %s15, 0
      %p103 = por %p101, %p102
      %p104 = scmp.ne.s32.totalorder %s96, %s98
      %p105 = scmp.eq.s32.totalorder %s20, 1
      %p106 = por %p104, %p105
      %p107 = scmp.ne.s32.totalorder %s98, %s99
      %p108 = scmp.eq.s32.totalorder %s20, 0
      %p109 = por %p107, %p108
      %p110 = scmp.ne.s32.totalorder %s98, %s99
      %p111 = scmp.eq.s32.totalorder %s21, 1
      %p112 = por %p110, %p111
      %p114 = scmp.ne.s32.totalorder %s99, %s113
      %p115 = scmp.eq.s32.totalorder %s21, 0
      %p116 = por %p114, %p115
      %s118 = sadd.s32 %s117, 1
      %p121 = scmp.eq.s32.totalorder %s15, 1
      %p122 = scmp.ne.s32.totalorder %s117, %s119
      %p123 = scmp.eq.s32.totalorder %s15, 0
      %p124 = por %p122, %p123
      %p125 = scmp.ne.s32.totalorder %s117, %s119
      %p126 = scmp.eq.s32.totalorder %s20, 1
      %p127 = por %p125, %p126
      %p128 = scmp.ne.s32.totalorder %s119, %s120
      %p129 = scmp.eq.s32.totalorder %s20, 0
      %p130 = por %p128, %p129
      %p131 = scmp.ne.s32.totalorder %s119, %s120
      %p132 = scmp.eq.s32.totalorder %s21, 1
      %p133 = por %p131, %p132
      %p135 = scmp.ne.s32.totalorder %s120, %s134
      %p136 = scmp.eq.s32.totalorder %s21, 0
      %p137 = por %p135, %p136
      %s139 = sadd.s32 %s138, 1
      %p142 = scmp.eq.s32.totalorder %s15, 1
      %p143 = scmp.ne.s32.totalorder %s138, %s140
      %p144 = scmp.eq.s32.totalorder %s15, 0
      %p145 = por %p143, %p144
      %p146 = scmp.ne.s32.totalorder %s138, %s140
      %p147 = scmp.eq.s32.totalorder %s20, 1
      %p148 = por %p146, %p147
      %p149 = scmp.ne.s32.totalorder %s140, %s141
      %p150 = scmp.eq.s32.totalorder %s20, 0
      %p151 = por %p149, %p150
      %p152 = scmp.ne.s32.totalorder %s140, %s141
      %p153 = scmp.eq.s32.totalorder %s21, 1
      %p154 = por %p152, %p153
      %p156 = scmp.ne.s32.totalorder %s141, %s155
      %p157 = scmp.eq.s32.totalorder %s21, 0
      %p158 = por %p156, %p157
      %s159 = ssub.s32 %s15, %s22
      %p160 = scmp.eq.s32.totalorder %s159, 0
      %s162 = sadd.s32 %s161, 1
      %s163 = scalar_select %p160, %s161, %s162
      %p166 = pneg %p160
      %p167 = scmp.eq.s32.totalorder %s15, 1
      %p168 = por %p166, %p167
      %p169 = scmp.ne.s32.totalorder %s161, %s164
      %p170 = scmp.eq.s32.totalorder %s15, 0
      %p171 = por %p169, %p170
      %p172 = scmp.ne.s32.totalorder %s161, %s164
      %p173 = scmp.eq.s32.totalorder %s20, 1
      %p174 = por %p172, %p173
      %p175 = scmp.ne.s32.totalorder %s164, %s165
      %p176 = scmp.eq.s32.totalorder %s20, 0
      %p177 = por %p175, %p176
      %p178 = scmp.ne.s32.totalorder %s164, %s165
      %p179 = scmp.eq.s32.totalorder %s21, 1
      %p180 = por %p178, %p179
      %p182 = scmp.ne.s32.totalorder %s165, %s181
      %p183 = scmp.eq.s32.totalorder %s21, 0
      %p184 = por %p182, %p183
      %p185 = scmp.le.s32.totalorder 1, %s15
      %p186 = scmp.lt.s32.totalorder %s15, 3
      %p187 = pnand %p185, %p186
      %p188 = pneg %p187
      // Predicated region
      $region9: #{tpu_custom_call.1} parent=5 // pred_check
        _
      $region10: #{tpu_custom_call.1} parent=5 // pred_check_branch
        %190 = sbr.rel (%p187) target = $region12
      $region11: #{tpu_custom_call.1} parent=5 // pred_region
        %s191 = ssub.s32 %s15, 1
        // Predicated region
        $region13: #{tpu_custom_call.1} parent=11 // pred_check
          %p192 = pneg %p88
        $region14: #{tpu_custom_call.1} parent=11 // pred_check_branch
          %194 = sbr.rel (%p192) target = $region16
        $region15: #{tpu_custom_call.1} parent=11 // pred_region
          _
        $region16: #{tpu_custom_call.1} parent=11 // pred_fallthru
          _
        // Predicated region
        $region17: #{tpu_custom_call.1} parent=11 // pred_check
          %p195 = pneg %p109
        $region18: #{tpu_custom_call.1} parent=11 // pred_check_branch
          %197 = sbr.rel (%p195) target = $region20
        $region19: #{tpu_custom_call.1} parent=11 // pred_region
          _
        $region20: #{tpu_custom_call.1} parent=11 // pred_fallthru
          _
        // Predicated region
        $region21: #{tpu_custom_call.1} parent=11 // pred_check
          %p198 = pneg %p130
        $region22: #{tpu_custom_call.1} parent=11 // pred_check_branch
          %200 = sbr.rel (%p198) target = $region24
        $region23: #{tpu_custom_call.1} parent=11 // pred_region
          _
        $region24: #{tpu_custom_call.1} parent=11 // pred_fallthru
          _
        // Predicated region
        $region25: #{tpu_custom_call.1} parent=11 // pred_check
          %p201 = pneg %p151
        $region26: #{tpu_custom_call.1} parent=11 // pred_check_branch
          %203 = sbr.rel (%p201) target = $region28
        $region27: #{tpu_custom_call.1} parent=11 // pred_region
          _
        $region28: #{tpu_custom_call.1} parent=11 // pred_fallthru
          _
      $region12: #{tpu_custom_call.1} parent=5 // pred_fallthru
        _
      %p204 = scmp.lt.s32.totalorder %s15, 2
      // Predicated region
      $region29: #{tpu_custom_call.1} parent=5 // pred_check
        %p205 = pneg %p204
      $region30: #{tpu_custom_call.1} parent=5 // pred_check_branch
        %207 = sbr.rel (%p205) target = $region32
      $region31: #{tpu_custom_call.1} parent=5 // pred_region
        // Predicated region
        $region33: #{tpu_custom_call.1} parent=31 // pred_check
          %p208 = pneg %p35
        $region34: #{tpu_custom_call.1} parent=31 // pred_check_branch
          %210 = sbr.rel (%p208) target = $region36
        $region35: #{tpu_custom_call.1} parent=31 // pred_region
          %p211 = scmp.lt.s32.totalorder %s15, 1
          %s212 = scalar_select %p211, %s15, 1
          %s213 = smul.addr %s212, 2
          %s214 = smul.addr %s213, 4
          %s215 = scalar_lea.vmem %s0, %s214
        $region36: #{tpu_custom_call.1} parent=31 // pred_fallthru
          _
        // Predicated region
        $region37: #{tpu_custom_call.1} parent=31 // pred_check
          %p216 = pneg %p61
        $region38: #{tpu_custom_call.1} parent=31 // pred_check_branch
          %218 = sbr.rel (%p216) target = $region40
        $region39: #{tpu_custom_call.1} parent=31 // pred_region
          %p219 = scmp.lt.s32.totalorder %s15, 1
          %s220 = scalar_select %p219, %s15, 1
          %s221 = smul.addr %s220, 2
          %s222 = smul.addr %s221, 8
          %s223 = scalar_lea.vmem %s1, %s222
        $region40: #{tpu_custom_call.1} parent=31 // pred_fallthru
          _
      $region32: #{tpu_custom_call.1} parent=5 // pred_fallthru
        _
      %p224 = scmp.le.s32.totalorder 1, %s15
      %p225 = scmp.lt.s32.totalorder %s15, 3
      %p226 = pnand %p224, %p225
      %p227 = pneg %p226
      // Predicated region
      $region41: #{tpu_custom_call.1} parent=5 // pred_check
        _
      $region42: #{tpu_custom_call.1} parent=5 // pred_check_branch
        %229 = sbr.rel (%p226) target = $region44
      $region43: #{tpu_custom_call.1} parent=5 // pred_region
        %s230 = ssub.s32 %s15, 1
        %p231 = scmp.lt.s32.totalorder %s20, 1
        %s232 = scalar_select %p231, %s20, 1
        %s233 = smul.addr %s232, 2
        %s234 = smul.addr %s233, 4
        %s235 = scalar_lea.vmem %s0, %s234
        %p236 = pneg %p41
        %p237 = pneg %p38
        %p238 = scmp.lt.s32.totalorder %s20, 1
        %s239 = scalar_select %p238, %s20, 1
        %s240 = smul.addr %s239, 2
        %s241 = smul.addr %s240, 8
        %s242 = scalar_lea.vmem %s1, %s241
        %p243 = pneg %p67
        %p244 = pneg %p64
        %p245 = pneg %p88
        %p246 = pneg %p85
        %p247 = pneg %p109
        %p248 = pneg %p106
        %p249 = pneg %p130
        %p250 = pneg %p127
        %p251 = pneg %p151
        %p252 = pneg %p148
        %p253 = pneg %p177
        %p254 = pneg %p174
        %s255 = sand.u32 %s164, 1
        %s256 = scalar_lea.sflag [#allocation5], %s255
        %s257 = sand.u32 %s164, 1
        %s258 = smul.addr %s257, 8
        %s259 = scalar_lea.vmem [#allocation4], %s258
        %p260 = scmp.lt.s32.totalorder %s20, 1
        %s261 = scalar_select %p260, %s20, 1
        %s262 = smul.addr %s261, 2
        %s263 = smul.addr %s262, 4
        %s264 = scalar_lea.vmem %s0, %s263
        %p265 = scmp.lt.s32.totalorder %s20, 1
        %s266 = scalar_select %p265, %s20, 1
        %s267 = smul.addr %s266, 2
        %s268 = smul.addr %s267, 8
        %s269 = scalar_lea.vmem %s1, %s268
        %v270 = vld [vmem:[%s5] ss:$2 sm:$0x3]
        %s271 = scalar_lea.vmem %s5, 1
        %v272 = vld [vmem:[%s271] ss:$2 sm:$0x3]
        %v273 = vld [vmem:[%s264] sm:$0xff]
        %274 = vst [vmem:[#allocation2] sm:$0xff] 0.0
        %275 = vst [vmem:[#allocation2 + $0x8] sm:$0xff] 0.0
        %276 = vst [vmem:[#allocation2 + $0x4] sm:$0xff] %v273
        %v277 = vld [vmem:[%s4] sm:$0xf]
        %v278 = vld [vmem:[#allocation2] sm:$0xff]
        %v279 = vld [vmem:[#allocation2 + $0x8] sm:$0xff]
        %v281 = vlaneseq
        %v282 = vshrl.u32 %v281, 7
        %v283 = vsub.s32 0, %v282
        %v284 = vrot.slane %v270, %v283
        %v285 = vlaneseq
        %v286 = vshrl.u32 %v285, 7
        %v287 = vsub.s32 1, %v286
        %v288 = vrot.slane %v270, %v287
        %v289 = vcombine.low %v284, %v288
        %290 = vrot.lane.b32.xlu0 %v289, 111
        %v291 = vpop.permute.xlu0 %290
        %v292 = vrot.slane %v291, 4
        %vm293 = vcmask 908288
        %v294 = vsel %vm293, %v292, %v291
        %v297 = vmul.f32 %v278, %v294
        %v298 = vmul.f32 %v279, %v292
        %v299 = vld [vmem:[%s2] sm:$0xf]
        %s300 = scalar_lea.vmem %s2, 4
        %v301 = vld [vmem:[%s300] sm:$0xf]
        %v304 = vcombine.high %v278, %v278
        %305 = vrot.lane.b32.xlu0 %v278, 16
        %v306 = vpop.permute.xlu0 %305
        %307 = vrot.lane.b32.xlu0 %v304, 16
        %v308 = vpop.permute.xlu0 %307
        %309 = vrot.lane.b32.xlu0 %v279, 16
        %v310 = vpop.permute.xlu0 %309
        %vm311 = vcmask 130048
        %v312 = vsel %vm311, %v306, %v308
        %v313 = vsel %vm311, %v308, %v310
        %vm314 = vcmask 31744
        %v316 = vsel %vm314, %v301, 0
        %vm318 = vcmask 1043456
        %v319 = vsel %vm318, %v312, 0
        %v321 = vsel %vm318, %v313, 0
        %323 = vmatprep.subr.mxu0 %v321
        %324 = vmatpush1.msra.mxu0 %v319
        %325 = vmatprep.subr.mxu0 0.0
        %326 = vmatpush1.msra.mxu0 0.0
        %327 = vmatprep.subr.mxu0 0.0
        %328 = vmatpush1.msra.mxu0 0.0
        %329 = vmatprep.subr.mxu0 0.0
        %330 = vmatpush1.msra.mxu0 0.0
        %331 = vmatprep.subr.mxu0 0.0
        %332 = vmatpush1.msra.mxu0 0.0
        %333 = vmatprep.subr.mxu0 0.0
        %334 = vmatpush1.msra.mxu0 0.0
        %335 = vmatprep.subr.mxu0 0.0
        %336 = vmatpush1.msra.mxu0 0.0
        %337 = vmatprep.subr.mxu0 0.0
        %338 = vmatpush1.msra.mxu0 0.0
        %339 = vmatprep.subr.mxu0 0.0
        %340 = vmatpush1.msra.mxu0 0.0
        %341 = vmatprep.subr.mxu0 0.0
        %342 = vmatpush1.msra.mxu0 0.0
        %343 = vmatprep.subr.mxu0 0.0
        %344 = vmatpush1.msra.mxu0 0.0
        %345 = vmatprep.subr.mxu0 0.0
        %346 = vmatpush1.msra.mxu0 0.0
        %347 = vmatprep.subr.mxu0 0.0
        %348 = vmatpush1.msra.mxu0 0.0
        %349 = vmatprep.subr.mxu0 0.0
        %350 = vmatpush1.msra.mxu0 0.0
        %351 = vmatprep.subr.mxu0 0.0
        %352 = vmatpush1.msra.mxu0 0.0
        %353 = vmatprep.subr.mxu0 0.0
        %354 = vmatpush1.msra.mxu0 0.0
        %355 = vmatprep.subr.mxu0 0.0
        %356 = vmatpush1.msra.mxu0 0.0
        %357 = vmatprep.subr.mxu0 0.0
        %358 = vmatpush1.msra.mxu0 0.0
        %359 = vmatprep.subr.mxu0 0.0
        %360 = vmatpush1.msra.mxu0 0.0
        %361 = vmatprep.subr.mxu0 0.0
        %362 = vmatpush1.msra.mxu0 0.0
        %363 = vmatprep.subr.mxu0 0.0
        %364 = vmatpush1.msra.mxu0 0.0
        %365 = vmatprep.subr.mxu0 0.0
        %366 = vmatpush1.msra.mxu0 0.0
        %367 = vmatprep.subr.mxu0 0.0
        %368 = vmatpush1.msra.mxu0 0.0
        %369 = vmatprep.subr.mxu0 0.0
        %370 = vmatpush1.msra.mxu0 0.0
        %371 = vmatprep.subr.mxu0 0.0
        %372 = vmatpush1.msra.mxu0 0.0
        %373 = vmatprep.subr.mxu0 0.0
        %374 = vmatpush1.msra.mxu0 0.0
        %375 = vmatprep.subr.mxu0 0.0
        %376 = vmatpush1.msra.mxu0 0.0
        %377 = vmatprep.subr.mxu0 0.0
        %378 = vmatpush1.msra.mxu0 0.0
        %379 = vmatprep.subr.mxu0 0.0
        %380 = vmatpush1.msra.mxu0 0.0
        %381 = vmatprep.subr.mxu0 0.0
        %382 = vmatpush1.msra.mxu0 0.0
        %383 = vmatprep.subr.mxu0 0.0
        %384 = vmatpush1.msra.mxu0 0.0
        %385 = vmatprep.subr.mxu0 0.0
        %386 = vmatpush1.msra.mxu0 0.0
        %387 = vmatprep.mubr.f32.mxu0 0.0
        %388 = vmatmul.mubr.f32.gmra.mrb[0].mxu0 %v316
        %v389 = vpop.f32.mrb[0].mxu0
        %v390 = vadd.f32 0.0, %v389
        %v391 = vpop.f32.mrb[0].mxu0
        %v392 = vadd.f32 0.0, %v391
        %393 = vdwg.mxu0
        %v396 = vcombine.high %v297, %v297
        %397 = vrot.lane.b32.xlu0 %v297, 17
        %v398 = vpop.permute.xlu0 %397
        %399 = vrot.lane.b32.xlu0 %v396, 17
        %v400 = vpop.permute.xlu0 %399
        %401 = vrot.lane.b32.xlu0 %v298, 17
        %v402 = vpop.permute.xlu0 %401
        %vm403 = vcmask 138240
        %v404 = vsel %vm403, %v398, %v400
        %v405 = vsel %vm403, %v400, %v402
        %v407 = vsel %vm314, %v299, 0
        %v409 = vsel %vm318, %v404, 0
        %v411 = vsel %vm318, %v405, 0
        %413 = vmatprep.subr.mxu0 %v411
        %414 = vmatpush1.msra.mxu0 %v409
        %415 = vmatprep.subr.mxu0 0.0
        %416 = vmatpush1.msra.mxu0 0.0
        %417 = vmatprep.subr.mxu0 0.0
        %418 = vmatpush1.msra.mxu0 0.0
        %419 = vmatprep.subr.mxu0 0.0
        %420 = vmatpush1.msra.mxu0 0.0
        %421 = vmatprep.subr.mxu0 0.0
        %422 = vmatpush1.msra.mxu0 0.0
        %423 = vmatprep.subr.mxu0 0.0
        %424 = vmatpush1.msra.mxu0 0.0
        %425 = vmatprep.subr.mxu0 0.0
        %426 = vmatpush1.msra.mxu0 0.0
        %427 = vmatprep.subr.mxu0 0.0
        %428 = vmatpush1.msra.mxu0 0.0
        %429 = vmatprep.subr.mxu0 0.0
        %430 = vmatpush1.msra.mxu0 0.0
        %431 = vmatprep.subr.mxu0 0.0
        %432 = vmatpush1.msra.mxu0 0.0
        %433 = vmatprep.subr.mxu0 0.0
        %434 = vmatpush1.msra.mxu0 0.0
        %435 = vmatprep.subr.mxu0 0.0
        %436 = vmatpush1.msra.mxu0 0.0
        %437 = vmatprep.subr.mxu0 0.0
        %438 = vmatpush1.msra.mxu0 0.0
        %439 = vmatprep.subr.mxu0 0.0
        %440 = vmatpush1.msra.mxu0 0.0
        %441 = vmatprep.subr.mxu0 0.0
        %442 = vmatpush1.msra.mxu0 0.0
        %443 = vmatprep.subr.mxu0 0.0
        %444 = vmatpush1.msra.mxu0 0.0
        %445 = vmatprep.subr.mxu0 0.0
        %446 = vmatpush1.msra.mxu0 0.0
        %447 = vmatprep.subr.mxu0 0.0
        %448 = vmatpush1.msra.mxu0 0.0
        %449 = vmatprep.subr.mxu0 0.0
        %450 = vmatpush1.msra.mxu0 0.0
        %451 = vmatprep.subr.mxu0 0.0
        %452 = vmatpush1.msra.mxu0 0.0
        %453 = vmatprep.subr.mxu0 0.0
        %454 = vmatpush1.msra.mxu0 0.0
        %455 = vmatprep.subr.mxu0 0.0
        %456 = vmatpush1.msra.mxu0 0.0
        %457 = vmatprep.subr.mxu0 0.0
        %458 = vmatpush1.msra.mxu0 0.0
        %459 = vmatprep.subr.mxu0 0.0
        %460 = vmatpush1.msra.mxu0 0.0
        %461 = vmatprep.subr.mxu0 0.0
        %462 = vmatpush1.msra.mxu0 0.0
        %463 = vmatprep.subr.mxu0 0.0
        %464 = vmatpush1.msra.mxu0 0.0
        %465 = vmatprep.subr.mxu0 0.0
        %466 = vmatpush1.msra.mxu0 0.0
        %467 = vmatprep.subr.mxu0 0.0
        %468 = vmatpush1.msra.mxu0 0.0
        %469 = vmatprep.subr.mxu0 0.0
        %470 = vmatpush1.msra.mxu0 0.0
        %471 = vmatprep.subr.mxu0 0.0
        %472 = vmatpush1.msra.mxu0 0.0
        %473 = vmatprep.subr.mxu0 0.0
        %474 = vmatpush1.msra.mxu0 0.0
        %475 = vmatprep.subr.mxu0 0.0
        %476 = vmatpush1.msra.mxu0 0.0
        %477 = vmatprep.mubr.f32.mxu0 0.0
        %478 = vmatmul.mubr.f32.gmra.mrb[0].mxu0 %v407
        %v479 = vpop.f32.mrb[0].mxu0
        %v480 = vadd.f32 %v390, %v479
        %v481 = vpop.f32.mrb[0].mxu0
        %v482 = vadd.f32 %v392, %v481
        %483 = vdwg.mxu0
        %v485 = vlaneseq
        %v486 = vshrl.u32 %v485, 7
        %v487 = vsub.s32 0, %v486
        %v488 = vrot.slane %v272, %v487
        %v489 = vlaneseq
        %v490 = vshrl.u32 %v489, 7
        %v491 = vsub.s32 1, %v490
        %v492 = vrot.slane %v272, %v491
        %v493 = vcombine.low %v488, %v492
        %494 = vrot.lane.b32.xlu0 %v493, 113
        %v495 = vpop.permute.xlu0 %494
        %v496 = vrot.slane %v495, 4
        %vm497 = vcmask 924672
        %v498 = vsel %vm497, %v496, %v495
        %v501 = vmul.f32 %v278, %v498
        %v502 = vmul.f32 %v279, %v496
        %s503 = scalar_lea.vmem %s2, 8
        %v504 = vld [vmem:[%s503] sm:$0xf]
        %v507 = vcombine.high %v501, %v501
        %508 = vrot.lane.b32.xlu0 %v501, 15
        %v509 = vpop.permute.xlu0 %508
        %510 = vrot.lane.b32.xlu0 %v507, 15
        %v511 = vpop.permute.xlu0 %510
        %512 = vrot.lane.b32.xlu0 %v502, 15
        %v513 = vpop.permute.xlu0 %512
        %vm514 = vcmask 121856
        %v515 = vsel %vm514, %v509, %v511
        %v516 = vsel %vm514, %v511, %v513
        %v518 = vsel %vm314, %v504, 0
        %v520 = vsel %vm318, %v515, 0
        %v522 = vsel %vm318, %v516, 0
        %524 = vmatprep.subr.mxu0 %v522
        %525 = vmatpush1.msra.mxu0 %v520
        %526 = vmatprep.subr.mxu0 0.0
        %527 = vmatpush1.msra.mxu0 0.0
        %528 = vmatprep.subr.mxu0 0.0
        %529 = vmatpush1.msra.mxu0 0.0
        %530 = vmatprep.subr.mxu0 0.0
        %531 = vmatpush1.msra.mxu0 0.0
        %532 = vmatprep.subr.mxu0 0.0
        %533 = vmatpush1.msra.mxu0 0.0
        %534 = vmatprep.subr.mxu0 0.0
        %535 = vmatpush1.msra.mxu0 0.0
        %536 = vmatprep.subr.mxu0 0.0
        %537 = vmatpush1.msra.mxu0 0.0
        %538 = vmatprep.subr.mxu0 0.0
        %539 = vmatpush1.msra.mxu0 0.0
        %540 = vmatprep.subr.mxu0 0.0
        %541 = vmatpush1.msra.mxu0 0.0
        %542 = vmatprep.subr.mxu0 0.0
        %543 = vmatpush1.msra.mxu0 0.0
        %544 = vmatprep.subr.mxu0 0.0
        %545 = vmatpush1.msra.mxu0 0.0
        %546 = vmatprep.subr.mxu0 0.0
        %547 = vmatpush1.msra.mxu0 0.0
        %548 = vmatprep.subr.mxu0 0.0
        %549 = vmatpush1.msra.mxu0 0.0
        %550 = vmatprep.subr.mxu0 0.0
        %551 = vmatpush1.msra.mxu0 0.0
        %552 = vmatprep.subr.mxu0 0.0
        %553 = vmatpush1.msra.mxu0 0.0
        %554 = vmatprep.subr.mxu0 0.0
        %555 = vmatpush1.msra.mxu0 0.0
        %556 = vmatprep.subr.mxu0 0.0
        %557 = vmatpush1.msra.mxu0 0.0
        %558 = vmatprep.subr.mxu0 0.0
        %559 = vmatpush1.msra.mxu0 0.0
        %560 = vmatprep.subr.mxu0 0.0
        %561 = vmatpush1.msra.mxu0 0.0
        %562 = vmatprep.subr.mxu0 0.0
        %563 = vmatpush1.msra.mxu0 0.0
        %564 = vmatprep.subr.mxu0 0.0
        %565 = vmatpush1.msra.mxu0 0.0
        %566 = vmatprep.subr.mxu0 0.0
        %567 = vmatpush1.msra.mxu0 0.0
        %568 = vmatprep.subr.mxu0 0.0
        %569 = vmatpush1.msra.mxu0 0.0
        %570 = vmatprep.subr.mxu0 0.0
        %571 = vmatpush1.msra.mxu0 0.0
        %572 = vmatprep.subr.mxu0 0.0
        %573 = vmatpush1.msra.mxu0 0.0
        %574 = vmatprep.subr.mxu0 0.0
        %575 = vmatpush1.msra.mxu0 0.0
        %576 = vmatprep.subr.mxu0 0.0
        %577 = vmatpush1.msra.mxu0 0.0
        %578 = vmatprep.subr.mxu0 0.0
        %579 = vmatpush1.msra.mxu0 0.0
        %580 = vmatprep.subr.mxu0 0.0
        %581 = vmatpush1.msra.mxu0 0.0
        %582 = vmatprep.subr.mxu0 0.0
        %583 = vmatpush1.msra.mxu0 0.0
        %584 = vmatprep.subr.mxu0 0.0
        %585 = vmatpush1.msra.mxu0 0.0
        %586 = vmatprep.subr.mxu0 0.0
        %587 = vmatpush1.msra.mxu0 0.0
        %588 = vmatprep.mubr.f32.mxu0 0.0
        %589 = vmatmul.mubr.f32.gmra.mrb[0].mxu0 %v518
        %v590 = vpop.f32.mrb[0].mxu0
        %v591 = vadd.f32 0.0, %v590
        %v592 = vpop.f32.mrb[0].mxu0
        %v593 = vadd.f32 0.0, %v592
        %594 = vdwg.mxu0
        %v595 = vadd.f32 %v480, %v591
        %v596 = vadd.f32 %v482, %v593
        %597 = vrot.lane.b32.xlu0 %v289, 127
        %v598 = vpop.permute.xlu0 %597
        %v599 = vrot.slane %v598, 4
        %vm600 = vcmask 1039360
        %v601 = vsel %vm600, %v599, %v598
        %v604 = vmul.f32 %v278, %v601
        %v605 = vmul.f32 %v279, %v599
        %s606 = scalar_lea.vmem %s2, 12
        %v607 = vld [vmem:[%s606] sm:$0xf]
        %v610 = vcombine.high %v604, %v604
        %611 = vrot.lane.b32.xlu0 %v604, 1
        %v612 = vpop.permute.xlu0 %611
        %613 = vrot.lane.b32.xlu0 %v610, 1
        %v614 = vpop.permute.xlu0 %613
        %615 = vrot.lane.b32.xlu0 %v605, 1
        %v616 = vpop.permute.xlu0 %615
        %vm617 = vcmask 7168
        %v618 = vsel %vm617, %v612, %v614
        %v619 = vsel %vm617, %v614, %v616
        %v621 = vsel %vm314, %v607, 0
        %v623 = vsel %vm318, %v618, 0
        %v625 = vsel %vm318, %v619, 0
        %627 = vmatprep.subr.mxu0 %v625
        %628 = vmatpush1.msra.mxu0 %v623
        %629 = vmatprep.subr.mxu0 0.0
        %630 = vmatpush1.msra.mxu0 0.0
        %631 = vmatprep.subr.mxu0 0.0
        %632 = vmatpush1.msra.mxu0 0.0
        %633 = vmatprep.subr.mxu0 0.0
        %634 = vmatpush1.msra.mxu0 0.0
        %635 = vmatprep.subr.mxu0 0.0
        %636 = vmatpush1.msra.mxu0 0.0
        %637 = vmatprep.subr.mxu0 0.0
        %638 = vmatpush1.msra.mxu0 0.0
        %639 = vmatprep.subr.mxu0 0.0
        %640 = vmatpush1.msra.mxu0 0.0
        %641 = vmatprep.subr.mxu0 0.0
        %642 = vmatpush1.msra.mxu0 0.0
        %643 = vmatprep.subr.mxu0 0.0
        %644 = vmatpush1.msra.mxu0 0.0
        %645 = vmatprep.subr.mxu0 0.0
        %646 = vmatpush1.msra.mxu0 0.0
        %647 = vmatprep.subr.mxu0 0.0
        %648 = vmatpush1.msra.mxu0 0.0
        %649 = vmatprep.subr.mxu0 0.0
        %650 = vmatpush1.msra.mxu0 0.0
        %651 = vmatprep.subr.mxu0 0.0
        %652 = vmatpush1.msra.mxu0 0.0
        %653 = vmatprep.subr.mxu0 0.0
        %654 = vmatpush1.msra.mxu0 0.0
        %655 = vmatprep.subr.mxu0 0.0
        %656 = vmatpush1.msra.mxu0 0.0
        %657 = vmatprep.subr.mxu0 0.0
        %658 = vmatpush1.msra.mxu0 0.0
        %659 = vmatprep.subr.mxu0 0.0
        %660 = vmatpush1.msra.mxu0 0.0
        %661 = vmatprep.subr.mxu0 0.0
        %662 = vmatpush1.msra.mxu0 0.0
        %663 = vmatprep.subr.mxu0 0.0
        %664 = vmatpush1.msra.mxu0 0.0
        %665 = vmatprep.subr.mxu0 0.0
        %666 = vmatpush1.msra.mxu0 0.0
        %667 = vmatprep.subr.mxu0 0.0
        %668 = vmatpush1.msra.mxu0 0.0
        %669 = vmatprep.subr.mxu0 0.0
        %670 = vmatpush1.msra.mxu0 0.0
        %671 = vmatprep.subr.mxu0 0.0
        %672 = vmatpush1.msra.mxu0 0.0
        %673 = vmatprep.subr.mxu0 0.0
        %674 = vmatpush1.msra.mxu0 0.0
        %675 = vmatprep.subr.mxu0 0.0
        %676 = vmatpush1.msra.mxu0 0.0
        %677 = vmatprep.subr.mxu0 0.0
        %678 = vmatpush1.msra.mxu0 0.0
        %679 = vmatprep.subr.mxu0 0.0
        %680 = vmatpush1.msra.mxu0 0.0
        %681 = vmatprep.subr.mxu0 0.0
        %682 = vmatpush1.msra.mxu0 0.0
        %683 = vmatprep.subr.mxu0 0.0
        %684 = vmatpush1.msra.mxu0 0.0
        %685 = vmatprep.subr.mxu0 0.0
        %686 = vmatpush1.msra.mxu0 0.0
        %687 = vmatprep.subr.mxu0 0.0
        %688 = vmatpush1.msra.mxu0 0.0
        %689 = vmatprep.subr.mxu0 0.0
        %690 = vmatpush1.msra.mxu0 0.0
        %691 = vmatprep.mubr.f32.mxu0 0.0
        %692 = vmatmul.mubr.f32.gmra.mrb[0].mxu0 %v621
        %v693 = vpop.f32.mrb[0].mxu0
        %v694 = vadd.f32 0.0, %v693
        %v695 = vpop.f32.mrb[0].mxu0
        %v696 = vadd.f32 0.0, %v695
        %697 = vdwg.mxu0
        %v698 = vadd.f32 %v595, %v694
        %v699 = vadd.f32 %v596, %v696
        %s700 = scalar_lea.vmem %s2, 16
        %v701 = vld [vmem:[%s700] sm:$0xf]
        %v703 = vsel %vm314, %v701, 0
        %v705 = vsel %vm318, %v304, 0
        %v707 = vsel %vm318, %v279, 0
        %709 = vmatprep.subr.mxu0 %v707
        %710 = vmatpush1.msra.mxu0 %v705
        %711 = vmatprep.subr.mxu0 0.0
        %712 = vmatpush1.msra.mxu0 0.0
        %713 = vmatprep.subr.mxu0 0.0
        %714 = vmatpush1.msra.mxu0 0.0
        %715 = vmatprep.subr.mxu0 0.0
        %716 = vmatpush1.msra.mxu0 0.0
        %717 = vmatprep.subr.mxu0 0.0
        %718 = vmatpush1.msra.mxu0 0.0
        %719 = vmatprep.subr.mxu0 0.0
        %720 = vmatpush1.msra.mxu0 0.0
        %721 = vmatprep.subr.mxu0 0.0
        %722 = vmatpush1.msra.mxu0 0.0
        %723 = vmatprep.subr.mxu0 0.0
        %724 = vmatpush1.msra.mxu0 0.0
        %725 = vmatprep.subr.mxu0 0.0
        %726 = vmatpush1.msra.mxu0 0.0
        %727 = vmatprep.subr.mxu0 0.0
        %728 = vmatpush1.msra.mxu0 0.0
        %729 = vmatprep.subr.mxu0 0.0
        %730 = vmatpush1.msra.mxu0 0.0
        %731 = vmatprep.subr.mxu0 0.0
        %732 = vmatpush1.msra.mxu0 0.0
        %733 = vmatprep.subr.mxu0 0.0
        %734 = vmatpush1.msra.mxu0 0.0
        %735 = vmatprep.subr.mxu0 0.0
        %736 = vmatpush1.msra.mxu0 0.0
        %737 = vmatprep.subr.mxu0 0.0
        %738 = vmatpush1.msra.mxu0 0.0
        %739 = vmatprep.subr.mxu0 0.0
        %740 = vmatpush1.msra.mxu0 0.0
        %741 = vmatprep.subr.mxu0 0.0
        %742 = vmatpush1.msra.mxu0 0.0
        %743 = vmatprep.subr.mxu0 0.0
        %744 = vmatpush1.msra.mxu0 0.0
        %745 = vmatprep.subr.mxu0 0.0
        %746 = vmatpush1.msra.mxu0 0.0
        %747 = vmatprep.subr.mxu0 0.0
        %748 = vmatpush1.msra.mxu0 0.0
        %749 = vmatprep.subr.mxu0 0.0
        %750 = vmatpush1.msra.mxu0 0.0
        %751 = vmatprep.subr.mxu0 0.0
        %752 = vmatpush1.msra.mxu0 0.0
        %753 = vmatprep.subr.mxu0 0.0
        %754 = vmatpush1.msra.mxu0 0.0
        %755 = vmatprep.subr.mxu0 0.0
        %756 = vmatpush1.msra.mxu0 0.0
        %757 = vmatprep.subr.mxu0 0.0
        %758 = vmatpush1.msra.mxu0 0.0
        %759 = vmatprep.subr.mxu0 0.0
        %760 = vmatpush1.msra.mxu0 0.0
        %761 = vmatprep.subr.mxu0 0.0
        %762 = vmatpush1.msra.mxu0 0.0
        %763 = vmatprep.subr.mxu0 0.0
        %764 = vmatpush1.msra.mxu0 0.0
        %765 = vmatprep.subr.mxu0 0.0
        %766 = vmatpush1.msra.mxu0 0.0
        %767 = vmatprep.subr.mxu0 0.0
        %768 = vmatpush1.msra.mxu0 0.0
        %769 = vmatprep.subr.mxu0 0.0
        %770 = vmatpush1.msra.mxu0 0.0
        %771 = vmatprep.subr.mxu0 0.0
        %772 = vmatpush1.msra.mxu0 0.0
        %773 = vmatprep.mubr.f32.mxu0 0.0
        %774 = vmatmul.mubr.f32.gmra.mrb[0].mxu0 %v703
        %v775 = vpop.f32.mrb[0].mxu0
        %v776 = vadd.f32 0.0, %v775
        %v777 = vpop.f32.mrb[0].mxu0
        %v778 = vadd.f32 0.0, %v777
        %779 = vdwg.mxu0
        %v780 = vadd.f32 %v698, %v776
        %v781 = vadd.f32 %v699, %v778
        %782 = vrot.lane.b32.xlu0 %v278, 127
        %v783 = vpop.permute.xlu0 %782
        %784 = vrot.lane.b32.xlu0 %v279, 127
        %v785 = vpop.permute.xlu0 %784
        %v786 = vrot.slane %v783, 4
        %v787 = vrot.slane %v785, 4
        %v788 = vsel %vm318, %v786, %v787
        %v789 = vsel %vm600, %v788, %v785
        %v792 = vmul.f32 %v789, %v493
        %s793 = scalar_lea.vmem %s2, 20
        %v794 = vld [vmem:[%s793] sm:$0xf]
        %v796 = vcombine.high %v792, %v792
        %v798 = vsel %vm314, %v794, 0
        %v800 = vsel %vm318, %v792, 0
        %v802 = vsel %vm318, %v796, 0
        %804 = vmatprep.subr.mxu0 %v802
        %805 = vmatpush1.msra.mxu0 %v800
        %806 = vmatprep.subr.mxu0 0.0
        %807 = vmatpush1.msra.mxu0 0.0
        %808 = vmatprep.subr.mxu0 0.0
        %809 = vmatpush1.msra.mxu0 0.0
        %810 = vmatprep.subr.mxu0 0.0
        %811 = vmatpush1.msra.mxu0 0.0
        %812 = vmatprep.subr.mxu0 0.0
        %813 = vmatpush1.msra.mxu0 0.0
        %814 = vmatprep.subr.mxu0 0.0
        %815 = vmatpush1.msra.mxu0 0.0
        %816 = vmatprep.subr.mxu0 0.0
        %817 = vmatpush1.msra.mxu0 0.0
        %818 = vmatprep.subr.mxu0 0.0
        %819 = vmatpush1.msra.mxu0 0.0
        %820 = vmatprep.subr.mxu0 0.0
        %821 = vmatpush1.msra.mxu0 0.0
        %822 = vmatprep.subr.mxu0 0.0
        %823 = vmatpush1.msra.mxu0 0.0
        %824 = vmatprep.subr.mxu0 0.0
        %825 = vmatpush1.msra.mxu0 0.0
        %826 = vmatprep.subr.mxu0 0.0
        %827 = vmatpush1.msra.mxu0 0.0
        %828 = vmatprep.subr.mxu0 0.0
        %829 = vmatpush1.msra.mxu0 0.0
        %830 = vmatprep.subr.mxu0 0.0
        %831 = vmatpush1.msra.mxu0 0.0
        %832 = vmatprep.subr.mxu0 0.0
        %833 = vmatpush1.msra.mxu0 0.0
        %834 = vmatprep.subr.mxu0 0.0
        %835 = vmatpush1.msra.mxu0 0.0
        %836 = vmatprep.subr.mxu0 0.0
        %837 = vmatpush1.msra.mxu0 0.0
        %838 = vmatprep.subr.mxu0 0.0
        %839 = vmatpush1.msra.mxu0 0.0
        %840 = vmatprep.subr.mxu0 0.0
        %841 = vmatpush1.msra.mxu0 0.0
        %842 = vmatprep.subr.mxu0 0.0
        %843 = vmatpush1.msra.mxu0 0.0
        %844 = vmatprep.subr.mxu0 0.0
        %845 = vmatpush1.msra.mxu0 0.0
        %846 = vmatprep.subr.mxu0 0.0
        %847 = vmatpush1.msra.mxu0 0.0
        %848 = vmatprep.subr.mxu0 0.0
        %849 = vmatpush1.msra.mxu0 0.0
        %850 = vmatprep.subr.mxu0 0.0
        %851 = vmatpush1.msra.mxu0 0.0
        %852 = vmatprep.subr.mxu0 0.0
        %853 = vmatpush1.msra.mxu0 0.0
        %854 = vmatprep.subr.mxu0 0.0
        %855 = vmatpush1.msra.mxu0 0.0
        %856 = vmatprep.subr.mxu0 0.0
        %857 = vmatpush1.msra.mxu0 0.0
        %858 = vmatprep.subr.mxu0 0.0
        %859 = vmatpush1.msra.mxu0 0.0
        %860 = vmatprep.subr.mxu0 0.0
        %861 = vmatpush1.msra.mxu0 0.0
        %862 = vmatprep.subr.mxu0 0.0
        %863 = vmatpush1.msra.mxu0 0.0
        %864 = vmatprep.subr.mxu0 0.0
        %865 = vmatpush1.msra.mxu0 0.0
        %866 = vmatprep.subr.mxu0 0.0
        %867 = vmatpush1.msra.mxu0 0.0
        %868 = vmatprep.mubr.f32.mxu0 0.0
        %869 = vmatmul.mubr.f32.gmra.mrb[0].mxu0 %v798
        %v870 = vpop.f32.mrb[0].mxu0
        %v871 = vadd.f32 0.0, %v870
        %v872 = vpop.f32.mrb[0].mxu0
        %v873 = vadd.f32 0.0, %v872
        %874 = vdwg.mxu0
        %v875 = vadd.f32 %v780, %v871
        %v876 = vadd.f32 %v781, %v873
        %877 = vrot.lane.b32.xlu0 %v278, 113
        %v878 = vpop.permute.xlu0 %877
        %879 = vrot.lane.b32.xlu0 %v279, 113
        %v880 = vpop.permute.xlu0 %879
        %v881 = vrot.slane %v878, 4
        %v882 = vrot.slane %v880, 4
        %v883 = vsel %vm318, %v881, %v882
        %v884 = vsel %vm497, %v883, %v880
        %v887 = vmul.f32 %v884, %v289
        %s888 = scalar_lea.vmem %s2, 24
        %v889 = vld [vmem:[%s888] sm:$0xf]
        %v891 = vcombine.high %v887, %v887
        %v893 = vsel %vm314, %v889, 0
        %v895 = vsel %vm318, %v887, 0
        %v897 = vsel %vm318, %v891, 0
        %899 = vmatprep.subr.mxu0 %v897
        %900 = vmatpush1.msra.mxu0 %v895
        %901 = vmatprep.subr.mxu0 0.0
        %902 = vmatpush1.msra.mxu0 0.0
        %903 = vmatprep.subr.mxu0 0.0
        %904 = vmatpush1.msra.mxu0 0.0
        %905 = vmatprep.subr.mxu0 0.0
        %906 = vmatpush1.msra.mxu0 0.0
        %907 = vmatprep.subr.mxu0 0.0
        %908 = vmatpush1.msra.mxu0 0.0
        %909 = vmatprep.subr.mxu0 0.0
        %910 = vmatpush1.msra.mxu0 0.0
        %911 = vmatprep.subr.mxu0 0.0
        %912 = vmatpush1.msra.mxu0 0.0
        %913 = vmatprep.subr.mxu0 0.0
        %914 = vmatpush1.msra.mxu0 0.0
        %915 = vmatprep.subr.mxu0 0.0
        %916 = vmatpush1.msra.mxu0 0.0
        %917 = vmatprep.subr.mxu0 0.0
        %918 = vmatpush1.msra.mxu0 0.0
        %919 = vmatprep.subr.mxu0 0.0
        %920 = vmatpush1.msra.mxu0 0.0
        %921 = vmatprep.subr.mxu0 0.0
        %922 = vmatpush1.msra.mxu0 0.0
        %923 = vmatprep.subr.mxu0 0.0
        %924 = vmatpush1.msra.mxu0 0.0
        %925 = vmatprep.subr.mxu0 0.0
        %926 = vmatpush1.msra.mxu0 0.0
        %927 = vmatprep.subr.mxu0 0.0
        %928 = vmatpush1.msra.mxu0 0.0
        %929 = vmatprep.subr.mxu0 0.0
        %930 = vmatpush1.msra.mxu0 0.0
        %931 = vmatprep.subr.mxu0 0.0
        %932 = vmatpush1.msra.mxu0 0.0
        %933 = vmatprep.subr.mxu0 0.0
        %934 = vmatpush1.msra.mxu0 0.0
        %935 = vmatprep.subr.mxu0 0.0
        %936 = vmatpush1.msra.mxu0 0.0
        %937 = vmatprep.subr.mxu0 0.0
        %938 = vmatpush1.msra.mxu0 0.0
        %939 = vmatprep.subr.mxu0 0.0
        %940 = vmatpush1.msra.mxu0 0.0
        %941 = vmatprep.subr.mxu0 0.0
        %942 = vmatpush1.msra.mxu0 0.0
        %943 = vmatprep.subr.mxu0 0.0
        %944 = vmatpush1.msra.mxu0 0.0
        %945 = vmatprep.subr.mxu0 0.0
        %946 = vmatpush1.msra.mxu0 0.0
        %947 = vmatprep.subr.mxu0 0.0
        %948 = vmatpush1.msra.mxu0 0.0
        %949 = vmatprep.subr.mxu0 0.0
        %950 = vmatpush1.msra.mxu0 0.0
        %951 = vmatprep.subr.mxu0 0.0
        %952 = vmatpush1.msra.mxu0 0.0
        %953 = vmatprep.subr.mxu0 0.0
        %954 = vmatpush1.msra.mxu0 0.0
        %955 = vmatprep.subr.mxu0 0.0
        %956 = vmatpush1.msra.mxu0 0.0
        %957 = vmatprep.subr.mxu0 0.0
        %958 = vmatpush1.msra.mxu0 0.0
        %959 = vmatprep.subr.mxu0 0.0
        %960 = vmatpush1.msra.mxu0 0.0
        %961 = vmatprep.subr.mxu0 0.0
        %962 = vmatpush1.msra.mxu0 0.0
        %963 = vmatprep.mubr.f32.mxu0 0.0
        %964 = vmatmul.mubr.f32.gmra.mrb[0].mxu0 %v893
        %v965 = vpop.f32.mrb[0].mxu0
        %v966 = vadd.f32 0.0, %v965
        %v967 = vpop.f32.mrb[0].mxu0
        %v968 = vadd.f32 0.0, %v967
        %969 = vdwg.mxu0
        %v970 = vadd.f32 %v875, %v966
        %v971 = vadd.f32 %v876, %v968
        %s972 = scalar_lea.vmem %s2, 28
        %v973 = vld [vmem:[%s972] sm:$0xf]
        %v974 = vcombine.high %v279, %v279
        %975 = vrot.lane.b32.xlu0 %v304, 112
        %v976 = vpop.permute.xlu0 %975
        %977 = vrot.lane.b32.xlu0 %v279, 112
        %v978 = vpop.permute.xlu0 %977
        %979 = vrot.lane.b32.xlu0 %v974, 112
        %v980 = vpop.permute.xlu0 %979
        %vm981 = vcmask 916480
        %v982 = vsel %vm981, %v976, %v978
        %v983 = vsel %vm981, %v978, %v980
        %v985 = vsel %vm314, %v973, 0
        %v987 = vsel %vm318, %v982, 0
        %v989 = vsel %vm318, %v983, 0
        %991 = vmatprep.subr.mxu0 %v989
        %992 = vmatpush1.msra.mxu0 %v987
        %993 = vmatprep.subr.mxu0 0.0
        %994 = vmatpush1.msra.mxu0 0.0
        %995 = vmatprep.subr.mxu0 0.0
        %996 = vmatpush1.msra.mxu0 0.0
        %997 = vmatprep.subr.mxu0 0.0
        %998 = vmatpush1.msra.mxu0 0.0
        %999 = vmatprep.subr.mxu0 0.0
        %1000 = vmatpush1.msra.mxu0 0.0
        %1001 = vmatprep.subr.mxu0 0.0
        %1002 = vmatpush1.msra.mxu0 0.0
        %1003 = vmatprep.subr.mxu0 0.0
        %1004 = vmatpush1.msra.mxu0 0.0
        %1005 = vmatprep.subr.mxu0 0.0
        %1006 = vmatpush1.msra.mxu0 0.0
        %1007 = vmatprep.subr.mxu0 0.0
        %1008 = vmatpush1.msra.mxu0 0.0
        %1009 = vmatprep.subr.mxu0 0.0
        %1010 = vmatpush1.msra.mxu0 0.0
        %1011 = vmatprep.subr.mxu0 0.0
        %1012 = vmatpush1.msra.mxu0 0.0
        %1013 = vmatprep.subr.mxu0 0.0
        %1014 = vmatpush1.msra.mxu0 0.0
        %1015 = vmatprep.subr.mxu0 0.0
        %1016 = vmatpush1.msra.mxu0 0.0
        %1017 = vmatprep.subr.mxu0 0.0
        %1018 = vmatpush1.msra.mxu0 0.0
        %1019 = vmatprep.subr.mxu0 0.0
        %1020 = vmatpush1.msra.mxu0 0.0
        %1021 = vmatprep.subr.mxu0 0.0
        %1022 = vmatpush1.msra.mxu0 0.0
        %1023 = vmatprep.subr.mxu0 0.0
        %1024 = vmatpush1.msra.mxu0 0.0
        %1025 = vmatprep.subr.mxu0 0.0
        %1026 = vmatpush1.msra.mxu0 0.0
        %1027 = vmatprep.subr.mxu0 0.0
        %1028 = vmatpush1.msra.mxu0 0.0
        %1029 = vmatprep.subr.mxu0 0.0
        %1030 = vmatpush1.msra.mxu0 0.0
        %1031 = vmatprep.subr.mxu0 0.0
        %1032 = vmatpush1.msra.mxu0 0.0
        %1033 = vmatprep.subr.mxu0 0.0
        %1034 = vmatpush1.msra.mxu0 0.0
        %1035 = vmatprep.subr.mxu0 0.0
        %1036 = vmatpush1.msra.mxu0 0.0
        %1037 = vmatprep.subr.mxu0 0.0
        %1038 = vmatpush1.msra.mxu0 0.0
        %1039 = vmatprep.subr.mxu0 0.0
        %1040 = vmatpush1.msra.mxu0 0.0
        %1041 = vmatprep.subr.mxu0 0.0
        %1042 = vmatpush1.msra.mxu0 0.0
        %1043 = vmatprep.subr.mxu0 0.0
        %1044 = vmatpush1.msra.mxu0 0.0
        %1045 = vmatprep.subr.mxu0 0.0
        %1046 = vmatpush1.msra.mxu0 0.0
        %1047 = vmatprep.subr.mxu0 0.0
        %1048 = vmatpush1.msra.mxu0 0.0
        %1049 = vmatprep.subr.mxu0 0.0
        %1050 = vmatpush1.msra.mxu0 0.0
        %1051 = vmatprep.subr.mxu0 0.0
        %1052 = vmatpush1.msra.mxu0 0.0
        %1053 = vmatprep.subr.mxu0 0.0
        %1054 = vmatpush1.msra.mxu0 0.0
        %1055 = vmatprep.mubr.f32.mxu0 0.0
        %1056 = vmatmul.mubr.f32.gmra.mrb[0].mxu0 %v985
        %v1057 = vpop.f32.mrb[0].mxu0
        %v1058 = vadd.f32 0.0, %v1057
        %v1059 = vpop.f32.mrb[0].mxu0
        %v1060 = vadd.f32 0.0, %v1059
        %1061 = vdwg.mxu0
        %v1062 = vadd.f32 %v970, %v1058
        %v1063 = vadd.f32 %v971, %v1060
        %1064 = vrot.lane.b32.xlu0 %v278, 111
        %v1065 = vpop.permute.xlu0 %1064
        %1066 = vrot.lane.b32.xlu0 %v279, 111
        %v1067 = vpop.permute.xlu0 %1066
        %v1068 = vrot.slane %v1065, 4
        %v1069 = vrot.slane %v1067, 4
        %v1070 = vsel %vm318, %v1068, %v1069
        %v1071 = vsel %vm293, %v1070, %v1067
        %v1073 = vmul.f32 %v1071, %v493
        %s1074 = scalar_lea.vmem %s2, 32
        %v1075 = vld [vmem:[%s1074] sm:$0xf]
        %v1077 = vcombine.high %v1073, %v1073
        %v1079 = vsel %vm314, %v1075, 0
        %v1081 = vsel %vm318, %v1073, 0
        %v1083 = vsel %vm318, %v1077, 0
        %1085 = vmatprep.subr.mxu0 %v1083
        %1086 = vmatpush1.msra.mxu0 %v1081
        %1087 = vmatprep.subr.mxu0 0.0
        %1088 = vmatpush1.msra.mxu0 0.0
        %1089 = vmatprep.subr.mxu0 0.0
        %1090 = vmatpush1.msra.mxu0 0.0
        %1091 = vmatprep.subr.mxu0 0.0
        %1092 = vmatpush1.msra.mxu0 0.0
        %1093 = vmatprep.subr.mxu0 0.0
        %1094 = vmatpush1.msra.mxu0 0.0
        %1095 = vmatprep.subr.mxu0 0.0
        %1096 = vmatpush1.msra.mxu0 0.0
        %1097 = vmatprep.subr.mxu0 0.0
        %1098 = vmatpush1.msra.mxu0 0.0
        %1099 = vmatprep.subr.mxu0 0.0
        %1100 = vmatpush1.msra.mxu0 0.0
        %1101 = vmatprep.subr.mxu0 0.0
        %1102 = vmatpush1.msra.mxu0 0.0
        %1103 = vmatprep.subr.mxu0 0.0
        %1104 = vmatpush1.msra.mxu0 0.0
        %1105 = vmatprep.subr.mxu0 0.0
        %1106 = vmatpush1.msra.mxu0 0.0
        %1107 = vmatprep.subr.mxu0 0.0
        %1108 = vmatpush1.msra.mxu0 0.0
        %1109 = vmatprep.subr.mxu0 0.0
        %1110 = vmatpush1.msra.mxu0 0.0
        %1111 = vmatprep.subr.mxu0 0.0
        %1112 = vmatpush1.msra.mxu0 0.0
        %1113 = vmatprep.subr.mxu0 0.0
        %1114 = vmatpush1.msra.mxu0 0.0
        %1115 = vmatprep.subr.mxu0 0.0
        %1116 = vmatpush1.msra.mxu0 0.0
        %1117 = vmatprep.subr.mxu0 0.0
        %1118 = vmatpush1.msra.mxu0 0.0
        %1119 = vmatprep.subr.mxu0 0.0
        %1120 = vmatpush1.msra.mxu0 0.0
        %1121 = vmatprep.subr.mxu0 0.0
        %1122 = vmatpush1.msra.mxu0 0.0
        %1123 = vmatprep.subr.mxu0 0.0
        %1124 = vmatpush1.msra.mxu0 0.0
        %1125 = vmatprep.subr.mxu0 0.0
        %1126 = vmatpush1.msra.mxu0 0.0
        %1127 = vmatprep.subr.mxu0 0.0
        %1128 = vmatpush1.msra.mxu0 0.0
        %1129 = vmatprep.subr.mxu0 0.0
        %1130 = vmatpush1.msra.mxu0 0.0
        %1131 = vmatprep.subr.mxu0 0.0
        %1132 = vmatpush1.msra.mxu0 0.0
        %1133 = vmatprep.subr.mxu0 0.0
        %1134 = vmatpush1.msra.mxu0 0.0
        %1135 = vmatprep.subr.mxu0 0.0
        %1136 = vmatpush1.msra.mxu0 0.0
        %1137 = vmatprep.subr.mxu0 0.0
        %1138 = vmatpush1.msra.mxu0 0.0
        %1139 = vmatprep.subr.mxu0 0.0
        %1140 = vmatpush1.msra.mxu0 0.0
        %1141 = vmatprep.subr.mxu0 0.0
        %1142 = vmatpush1.msra.mxu0 0.0
        %1143 = vmatprep.subr.mxu0 0.0
        %1144 = vmatpush1.msra.mxu0 0.0
        %1145 = vmatprep.subr.mxu0 0.0
        %1146 = vmatpush1.msra.mxu0 0.0
        %1147 = vmatprep.subr.mxu0 0.0
        %1148 = vmatpush1.msra.mxu0 0.0
        %1149 = vmatprep.mubr.f32.mxu0 0.0
        %1150 = vmatmul.mubr.f32.gmra.mrb[0].mxu0 %v1079
        %v1151 = vpop.f32.mrb[0].mxu0
        %v1152 = vadd.f32 0.0, %v1151
        %v1153 = vpop.f32.mrb[0].mxu0
        %v1154 = vadd.f32 0.0, %v1153
        %1155 = vdwg.mxu0
        %v1156 = vadd.f32 %v1062, %v1152
        %v1157 = vadd.f32 %v1063, %v1154
        %1159 = vset.pattern.permute.xlu0 0
        %1160 = vperm.xlu0 %1159, %v277
        %v1161 = vpop.permute.xlu0 %1160
        %v1163 = vadd.f32 %v1156, %v1161
        %v1164 = vadd.f32 %v1157, %v1161
        %v1165 = vld [vmem:[%s269] sm:$0xf]
        %v1166 = vld [vmem:[%s269 + $0x4] sm:$0xf]
        %v1167 = vsel %vm318, %v1163, 0.0
        %v1168 = vsel %vm318, %v1164, 0.0
        %v1169 = vadd.f32 %v1167, %v1168
        %1170 = vadd.xlane.f32.xlu0 %v1169
        %v1171 = vpop.xlane.xlu0 %1170
        %v1172 = vrcp.pop 256.0
        %v1173 = vmul.f32 %v1171, %v1172
        %v1174 = vsub.f32 %v1163, %v1173
        %v1175 = vsub.f32 %v1164, %v1173
        %v1176 = vmul.f32 %v1174, %v1174
        %v1177 = vmul.f32 %v1175, %v1175
        %v1178 = vsel %vm318, %v1176, 0.0
        %v1179 = vsel %vm318, %v1177, 0.0
        %v1180 = vadd.f32 %v1178, %v1179
        %1181 = vadd.xlane.f32.xlu0 %v1180
        %v1182 = vpop.xlane.xlu0 %1181
        %v1183 = vmul.f32 %v1182, %v1172
        %v1184 = vadd.f32 %v1183, 1e-05
        %v1185 = vrsqrt.pop %v1184
        %v1186 = vmul.f32 %v1174, %v1185
        %v1187 = vmul.f32 %v1175, %v1185
        %1189 = vset.pattern.permute.xlu0 0
        %1190 = vperm.xlu0 %1189, %v1165
        %v1191 = vpop.permute.xlu0 %1190
        %v1193 = vmul.f32 %v1191, %v1186
        %v1194 = vmul.f32 %v1191, %v1187
        %1196 = vset.pattern.permute.xlu0 0
        %1197 = vperm.xlu0 %1196, %v1166
        %v1198 = vpop.permute.xlu0 %1197
        %v1200 = vadd.f32 %v1193, %v1198
        %v1201 = vadd.f32 %v1194, %v1198
        %v1202 = vmax.f32 %v1200, 0.0
        %v1203 = vmax.f32 %v1201, 0.0
        %1204 = vst [vmem:[#allocation3] sm:$0xff] 0.0
        %1205 = vst [vmem:[#allocation3 + $0x8] sm:$0xff] 0.0
        %v1208 = vcombine.low %v1202, %v1203
        %1210 = vst [vmem:[#allocation3 + $0x4] sm:$0xff] %v1208
        %v1211 = vld [vmem:[%s4 + $0x4] sm:$0xf]
        %v1212 = vld [vmem:[#allocation3] sm:$0xff]
        %v1213 = vld [vmem:[#allocation3 + $0x8] sm:$0xff]
        %v1214 = vmul.f32 %v1212, %v294
        %v1215 = vmul.f32 %v1213, %v292
        %v1216 = vld [vmem:[%s3] sm:$0xf]
        %s1217 = scalar_lea.vmem %s3, 4
        %v1218 = vld [vmem:[%s1217] sm:$0xf]
        %v1221 = vcombine.high %v1212, %v1212
        %1222 = vrot.lane.b32.xlu0 %v1212, 16
        %v1223 = vpop.permute.xlu0 %1222
        %1224 = vrot.lane.b32.xlu0 %v1221, 16
        %v1225 = vpop.permute.xlu0 %1224
        %1226 = vrot.lane.b32.xlu0 %v1213, 16
        %v1227 = vpop.permute.xlu0 %1226
        %v1228 = vsel %vm311, %v1223, %v1225
        %v1229 = vsel %vm311, %v1225, %v1227
        %v1231 = vsel %vm314, %v1218, 0
        %v1233 = vsel %vm318, %v1228, 0
        %v1235 = vsel %vm318, %v1229, 0
        %1237 = vmatprep.subr.mxu0 %v1235
        %1238 = vmatpush1.msra.mxu0 %v1233
        %1239 = vmatprep.subr.mxu0 0.0
        %1240 = vmatpush1.msra.mxu0 0.0
        %1241 = vmatprep.subr.mxu0 0.0
        %1242 = vmatpush1.msra.mxu0 0.0
        %1243 = vmatprep.subr.mxu0 0.0
        %1244 = vmatpush1.msra.mxu0 0.0
        %1245 = vmatprep.subr.mxu0 0.0
        %1246 = vmatpush1.msra.mxu0 0.0
        %1247 = vmatprep.subr.mxu0 0.0
        %1248 = vmatpush1.msra.mxu0 0.0
        %1249 = vmatprep.subr.mxu0 0.0
        %1250 = vmatpush1.msra.mxu0 0.0
        %1251 = vmatprep.subr.mxu0 0.0
        %1252 = vmatpush1.msra.mxu0 0.0
        %1253 = vmatprep.subr.mxu0 0.0
        %1254 = vmatpush1.msra.mxu0 0.0
        %1255 = vmatprep.subr.mxu0 0.0
        %1256 = vmatpush1.msra.mxu0 0.0
        %1257 = vmatprep.subr.mxu0 0.0
        %1258 = vmatpush1.msra.mxu0 0.0
        %1259 = vmatprep.subr.mxu0 0.0
        %1260 = vmatpush1.msra.mxu0 0.0
        %1261 = vmatprep.subr.mxu0 0.0
        %1262 = vmatpush1.msra.mxu0 0.0
        %1263 = vmatprep.subr.mxu0 0.0
        %1264 = vmatpush1.msra.mxu0 0.0
        %1265 = vmatprep.subr.mxu0 0.0
        %1266 = vmatpush1.msra.mxu0 0.0
        %1267 = vmatprep.subr.mxu0 0.0
        %1268 = vmatpush1.msra.mxu0 0.0
        %1269 = vmatprep.subr.mxu0 0.0
        %1270 = vmatpush1.msra.mxu0 0.0
        %1271 = vmatprep.subr.mxu0 0.0
        %1272 = vmatpush1.msra.mxu0 0.0
        %1273 = vmatprep.subr.mxu0 0.0
        %1274 = vmatpush1.msra.mxu0 0.0
        %1275 = vmatprep.subr.mxu0 0.0
        %1276 = vmatpush1.msra.mxu0 0.0
        %1277 = vmatprep.subr.mxu0 0.0
        %1278 = vmatpush1.msra.mxu0 0.0
        %1279 = vmatprep.subr.mxu0 0.0
        %1280 = vmatpush1.msra.mxu0 0.0
        %1281 = vmatprep.subr.mxu0 0.0
        %1282 = vmatpush1.msra.mxu0 0.0
        %1283 = vmatprep.subr.mxu0 0.0
        %1284 = vmatpush1.msra.mxu0 0.0
        %1285 = vmatprep.subr.mxu0 0.0
        %1286 = vmatpush1.msra.mxu0 0.0
        %1287 = vmatprep.subr.mxu0 0.0
        %1288 = vmatpush1.msra.mxu0 0.0
        %1289 = vmatprep.subr.mxu0 0.0
        %1290 = vmatpush1.msra.mxu0 0.0
        %1291 = vmatprep.subr.mxu0 0.0
        %1292 = vmatpush1.msra.mxu0 0.0
        %1293 = vmatprep.subr.mxu0 0.0
        %1294 = vmatpush1.msra.mxu0 0.0
        %1295 = vmatprep.subr.mxu0 0.0
        %1296 = vmatpush1.msra.mxu0 0.0
        %1297 = vmatprep.subr.mxu0 0.0
        %1298 = vmatpush1.msra.mxu0 0.0
        %1299 = vmatprep.subr.mxu0 0.0
        %1300 = vmatpush1.msra.mxu0 0.0
        %1301 = vmatprep.mubr.f32.mxu0 0.0
        %1302 = vmatmul.mubr.f32.gmra.mrb[0].mxu0 %v1231
        %v1303 = vpop.f32.mrb[0].mxu0
        %v1304 = vadd.f32 0.0, %v1303
        %v1305 = vpop.f32.mrb[0].mxu0
        %v1306 = vadd.f32 0.0, %v1305
        %1307 = vdwg.mxu0
        %v1310 = vcombine.high %v1214, %v1214
        %1311 = vrot.lane.b32.xlu0 %v1214, 17
        %v1312 = vpop.permute.xlu0 %1311
        %1313 = vrot.lane.b32.xlu0 %v1310, 17
        %v1314 = vpop.permute.xlu0 %1313
        %1315 = vrot.lane.b32.xlu0 %v1215, 17
        %v1316 = vpop.permute.xlu0 %1315
        %v1317 = vsel %vm403, %v1312, %v1314
        %v1318 = vsel %vm403, %v1314, %v1316
        %v1320 = vsel %vm314, %v1216, 0
        %v1322 = vsel %vm318, %v1317, 0
        %v1324 = vsel %vm318, %v1318, 0
        %1326 = vmatprep.subr.mxu0 %v1324
        %1327 = vmatpush1.msra.mxu0 %v1322
        %1328 = vmatprep.subr.mxu0 0.0
        %1329 = vmatpush1.msra.mxu0 0.0
        %1330 = vmatprep.subr.mxu0 0.0
        %1331 = vmatpush1.msra.mxu0 0.0
        %1332 = vmatprep.subr.mxu0 0.0
        %1333 = vmatpush1.msra.mxu0 0.0
        %1334 = vmatprep.subr.mxu0 0.0
        %1335 = vmatpush1.msra.mxu0 0.0
        %1336 = vmatprep.subr.mxu0 0.0
        %1337 = vmatpush1.msra.mxu0 0.0
        %1338 = vmatprep.subr.mxu0 0.0
        %1339 = vmatpush1.msra.mxu0 0.0
        %1340 = vmatprep.subr.mxu0 0.0
        %1341 = vmatpush1.msra.mxu0 0.0
        %1342 = vmatprep.subr.mxu0 0.0
        %1343 = vmatpush1.msra.mxu0 0.0
        %1344 = vmatprep.subr.mxu0 0.0
        %1345 = vmatpush1.msra.mxu0 0.0
        %1346 = vmatprep.subr.mxu0 0.0
        %1347 = vmatpush1.msra.mxu0 0.0
        %1348 = vmatprep.subr.mxu0 0.0
        %1349 = vmatpush1.msra.mxu0 0.0
        %1350 = vmatprep.subr.mxu0 0.0
        %1351 = vmatpush1.msra.mxu0 0.0
        %1352 = vmatprep.subr.mxu0 0.0
        %1353 = vmatpush1.msra.mxu0 0.0
        %1354 = vmatprep.subr.mxu0 0.0
        %1355 = vmatpush1.msra.mxu0 0.0
        %1356 = vmatprep.subr.mxu0 0.0
        %1357 = vmatpush1.msra.mxu0 0.0
        %1358 = vmatprep.subr.mxu0 0.0
        %1359 = vmatpush1.msra.mxu0 0.0
        %1360 = vmatprep.subr.mxu0 0.0
        %1361 = vmatpush1.msra.mxu0 0.0
        %1362 = vmatprep.subr.mxu0 0.0
        %1363 = vmatpush1.msra.mxu0 0.0
        %1364 = vmatprep.subr.mxu0 0.0
        %1365 = vmatpush1.msra.mxu0 0.0
        %1366 = vmatprep.subr.mxu0 0.0
        %1367 = vmatpush1.msra.mxu0 0.0
        %1368 = vmatprep.subr.mxu0 0.0
        %1369 = vmatpush1.msra.mxu0 0.0
        %1370 = vmatprep.subr.mxu0 0.0
        %1371 = vmatpush1.msra.mxu0 0.0
        %1372 = vmatprep.subr.mxu0 0.0
        %1373 = vmatpush1.msra.mxu0 0.0
        %1374 = vmatprep.subr.mxu0 0.0
        %1375 = vmatpush1.msra.mxu0 0.0
        %1376 = vmatprep.subr.mxu0 0.0
        %1377 = vmatpush1.msra.mxu0 0.0
        %1378 = vmatprep.subr.mxu0 0.0
        %1379 = vmatpush1.msra.mxu0 0.0
        %1380 = vmatprep.subr.mxu0 0.0
        %1381 = vmatpush1.msra.mxu0 0.0
        %1382 = vmatprep.subr.mxu0 0.0
        %1383 = vmatpush1.msra.mxu0 0.0
        %1384 = vmatprep.subr.mxu0 0.0
        %1385 = vmatpush1.msra.mxu0 0.0
        %1386 = vmatprep.subr.mxu0 0.0
        %1387 = vmatpush1.msra.mxu0 0.0
        %1388 = vmatprep.subr.mxu0 0.0
        %1389 = vmatpush1.msra.mxu0 0.0
        %1390 = vmatprep.mubr.f32.mxu0 0.0
        %1391 = vmatmul.mubr.f32.gmra.mrb[0].mxu0 %v1320
        %v1392 = vpop.f32.mrb[0].mxu0
        %v1393 = vadd.f32 %v1304, %v1392
        %v1394 = vpop.f32.mrb[0].mxu0
        %v1395 = vadd.f32 %v1306, %v1394
        %1396 = vdwg.mxu0
        %v1397 = vmul.f32 %v1212, %v498
        %v1398 = vmul.f32 %v1213, %v496
        %s1399 = scalar_lea.vmem %s3, 8
        %v1400 = vld [vmem:[%s1399] sm:$0xf]
        %v1403 = vcombine.high %v1397, %v1397
        %1404 = vrot.lane.b32.xlu0 %v1397, 15
        %v1405 = vpop.permute.xlu0 %1404
        %1406 = vrot.lane.b32.xlu0 %v1403, 15
        %v1407 = vpop.permute.xlu0 %1406
        %1408 = vrot.lane.b32.xlu0 %v1398, 15
        %v1409 = vpop.permute.xlu0 %1408
        %v1410 = vsel %vm514, %v1405, %v1407
        %v1411 = vsel %vm514, %v1407, %v1409
        %v1413 = vsel %vm314, %v1400, 0
        %v1415 = vsel %vm318, %v1410, 0
        %v1417 = vsel %vm318, %v1411, 0
        %1419 = vmatprep.subr.mxu0 %v1417
        %1420 = vmatpush1.msra.mxu0 %v1415
        %1421 = vmatprep.subr.mxu0 0.0
        %1422 = vmatpush1.msra.mxu0 0.0
        %1423 = vmatprep.subr.mxu0 0.0
        %1424 = vmatpush1.msra.mxu0 0.0
        %1425 = vmatprep.subr.mxu0 0.0
        %1426 = vmatpush1.msra.mxu0 0.0
        %1427 = vmatprep.subr.mxu0 0.0
        %1428 = vmatpush1.msra.mxu0 0.0
        %1429 = vmatprep.subr.mxu0 0.0
        %1430 = vmatpush1.msra.mxu0 0.0
        %1431 = vmatprep.subr.mxu0 0.0
        %1432 = vmatpush1.msra.mxu0 0.0
        %1433 = vmatprep.subr.mxu0 0.0
        %1434 = vmatpush1.msra.mxu0 0.0
        %1435 = vmatprep.subr.mxu0 0.0
        %1436 = vmatpush1.msra.mxu0 0.0
        %1437 = vmatprep.subr.mxu0 0.0
        %1438 = vmatpush1.msra.mxu0 0.0
        %1439 = vmatprep.subr.mxu0 0.0
        %1440 = vmatpush1.msra.mxu0 0.0
        %1441 = vmatprep.subr.mxu0 0.0
        %1442 = vmatpush1.msra.mxu0 0.0
        %1443 = vmatprep.subr.mxu0 0.0
        %1444 = vmatpush1.msra.mxu0 0.0
        %1445 = vmatprep.subr.mxu0 0.0
        %1446 = vmatpush1.msra.mxu0 0.0
        %1447 = vmatprep.subr.mxu0 0.0
        %1448 = vmatpush1.msra.mxu0 0.0
        %1449 = vmatprep.subr.mxu0 0.0
        %1450 = vmatpush1.msra.mxu0 0.0
        %1451 = vmatprep.subr.mxu0 0.0
        %1452 = vmatpush1.msra.mxu0 0.0
        %1453 = vmatprep.subr.mxu0 0.0
        %1454 = vmatpush1.msra.mxu0 0.0
        %1455 = vmatprep.subr.mxu0 0.0
        %1456 = vmatpush1.msra.mxu0 0.0
        %1457 = vmatprep.subr.mxu0 0.0
        %1458 = vmatpush1.msra.mxu0 0.0
        %1459 = vmatprep.subr.mxu0 0.0
        %1460 = vmatpush1.msra.mxu0 0.0
        %1461 = vmatprep.subr.mxu0 0.0
        %1462 = vmatpush1.msra.mxu0 0.0
        %1463 = vmatprep.subr.mxu0 0.0
        %1464 = vmatpush1.msra.mxu0 0.0
        %1465 = vmatprep.subr.mxu0 0.0
        %1466 = vmatpush1.msra.mxu0 0.0
        %1467 = vmatprep.subr.mxu0 0.0
        %1468 = vmatpush1.msra.mxu0 0.0
        %1469 = vmatprep.subr.mxu0 0.0
        %1470 = vmatpush1.msra.mxu0 0.0
        %1471 = vmatprep.subr.mxu0 0.0
        %1472 = vmatpush1.msra.mxu0 0.0
        %1473 = vmatprep.subr.mxu0 0.0
        %1474 = vmatpush1.msra.mxu0 0.0
        %1475 = vmatprep.subr.mxu0 0.0
        %1476 = vmatpush1.msra.mxu0 0.0
        %1477 = vmatprep.subr.mxu0 0.0
        %1478 = vmatpush1.msra.mxu0 0.0
        %1479 = vmatprep.subr.mxu0 0.0
        %1480 = vmatpush1.msra.mxu0 0.0
        %1481 = vmatprep.subr.mxu0 0.0
        %1482 = vmatpush1.msra.mxu0 0.0
        %1483 = vmatprep.mubr.f32.mxu0 0.0
        %1484 = vmatmul.mubr.f32.gmra.mrb[0].mxu0 %v1413
        %v1485 = vpop.f32.mrb[0].mxu0
        %v1486 = vadd.f32 0.0, %v1485
        %v1487 = vpop.f32.mrb[0].mxu0
        %v1488 = vadd.f32 0.0, %v1487
        %1489 = vdwg.mxu0
        %v1490 = vadd.f32 %v1393, %v1486
        %v1491 = vadd.f32 %v1395, %v1488
        %v1492 = vmul.f32 %v1212, %v601
        %v1493 = vmul.f32 %v1213, %v599
        %s1494 = scalar_lea.vmem %s3, 12
        %v1495 = vld [vmem:[%s1494] sm:$0xf]
        %v1498 = vcombine.high %v1492, %v1492
        %1499 = vrot.lane.b32.xlu0 %v1492, 1
        %v1500 = vpop.permute.xlu0 %1499
        %1501 = vrot.lane.b32.xlu0 %v1498, 1
        %v1502 = vpop.permute.xlu0 %1501
        %1503 = vrot.lane.b32.xlu0 %v1493, 1
        %v1504 = vpop.permute.xlu0 %1503
        %v1505 = vsel %vm617, %v1500, %v1502
        %v1506 = vsel %vm617, %v1502, %v1504
        %v1508 = vsel %vm314, %v1495, 0
        %v1510 = vsel %vm318, %v1505, 0
        %v1512 = vsel %vm318, %v1506, 0
        %1514 = vmatprep.subr.mxu0 %v1512
        %1515 = vmatpush1.msra.mxu0 %v1510
        %1516 = vmatprep.subr.mxu0 0.0
        %1517 = vmatpush1.msra.mxu0 0.0
        %1518 = vmatprep.subr.mxu0 0.0
        %1519 = vmatpush1.msra.mxu0 0.0
        %1520 = vmatprep.subr.mxu0 0.0
        %1521 = vmatpush1.msra.mxu0 0.0
        %1522 = vmatprep.subr.mxu0 0.0
        %1523 = vmatpush1.msra.mxu0 0.0
        %1524 = vmatprep.subr.mxu0 0.0
        %1525 = vmatpush1.msra.mxu0 0.0
        %1526 = vmatprep.subr.mxu0 0.0
        %1527 = vmatpush1.msra.mxu0 0.0
        %1528 = vmatprep.subr.mxu0 0.0
        %1529 = vmatpush1.msra.mxu0 0.0
        %1530 = vmatprep.subr.mxu0 0.0
        %1531 = vmatpush1.msra.mxu0 0.0
        %1532 = vmatprep.subr.mxu0 0.0
        %1533 = vmatpush1.msra.mxu0 0.0
        %1534 = vmatprep.subr.mxu0 0.0
        %1535 = vmatpush1.msra.mxu0 0.0
        %1536 = vmatprep.subr.mxu0 0.0
        %1537 = vmatpush1.msra.mxu0 0.0
        %1538 = vmatprep.subr.mxu0 0.0
        %1539 = vmatpush1.msra.mxu0 0.0
        %1540 = vmatprep.subr.mxu0 0.0
        %1541 = vmatpush1.msra.mxu0 0.0
        %1542 = vmatprep.subr.mxu0 0.0
        %1543 = vmatpush1.msra.mxu0 0.0
        %1544 = vmatprep.subr.mxu0 0.0
        %1545 = vmatpush1.msra.mxu0 0.0
        %1546 = vmatprep.subr.mxu0 0.0
        %1547 = vmatpush1.msra.mxu0 0.0
        %1548 = vmatprep.subr.mxu0 0.0
        %1549 = vmatpush1.msra.mxu0 0.0
        %1550 = vmatprep.subr.mxu0 0.0
        %1551 = vmatpush1.msra.mxu0 0.0
        %1552 = vmatprep.subr.mxu0 0.0
        %1553 = vmatpush1.msra.mxu0 0.0
        %1554 = vmatprep.subr.mxu0 0.0
        %1555 = vmatpush1.msra.mxu0 0.0
        %1556 = vmatprep.subr.mxu0 0.0
        %1557 = vmatpush1.msra.mxu0 0.0
        %1558 = vmatprep.subr.mxu0 0.0
        %1559 = vmatpush1.msra.mxu0 0.0
        %1560 = vmatprep.subr.mxu0 0.0
        %1561 = vmatpush1.msra.mxu0 0.0
        %1562 = vmatprep.subr.mxu0 0.0
        %1563 = vmatpush1.msra.mxu0 0.0
        %1564 = vmatprep.subr.mxu0 0.0
        %1565 = vmatpush1.msra.mxu0 0.0
        %1566 = vmatprep.subr.mxu0 0.0
        %1567 = vmatpush1.msra.mxu0 0.0
        %1568 = vmatprep.subr.mxu0 0.0
        %1569 = vmatpush1.msra.mxu0 0.0
        %1570 = vmatprep.subr.mxu0 0.0
        %1571 = vmatpush1.msra.mxu0 0.0
        %1572 = vmatprep.subr.mxu0 0.0
        %1573 = vmatpush1.msra.mxu0 0.0
        %1574 = vmatprep.subr.mxu0 0.0
        %1575 = vmatpush1.msra.mxu0 0.0
        %1576 = vmatprep.subr.mxu0 0.0
        %1577 = vmatpush1.msra.mxu0 0.0
        %1578 = vmatprep.mubr.f32.mxu0 0.0
        %1579 = vmatmul.mubr.f32.gmra.mrb[0].mxu0 %v1508
        %v1580 = vpop.f32.mrb[0].mxu0
        %v1581 = vadd.f32 0.0, %v1580
        %v1582 = vpop.f32.mrb[0].mxu0
        %v1583 = vadd.f32 0.0, %v1582
        %1584 = vdwg.mxu0
        %v1585 = vadd.f32 %v1490, %v1581
        %v1586 = vadd.f32 %v1491, %v1583
        %s1587 = scalar_lea.vmem %s3, 16
        %v1588 = vld [vmem:[%s1587] sm:$0xf]
        %v1590 = vsel %vm314, %v1588, 0
        %v1592 = vsel %vm318, %v1221, 0
        %v1594 = vsel %vm318, %v1213, 0
        %1596 = vmatprep.subr.mxu0 %v1594
        %1597 = vmatpush1.msra.mxu0 %v1592
        %1598 = vmatprep.subr.mxu0 0.0
        %1599 = vmatpush1.msra.mxu0 0.0
        %1600 = vmatprep.subr.mxu0 0.0
        %1601 = vmatpush1.msra.mxu0 0.0
        %1602 = vmatprep.subr.mxu0 0.0
        %1603 = vmatpush1.msra.mxu0 0.0
        %1604 = vmatprep.subr.mxu0 0.0
        %1605 = vmatpush1.msra.mxu0 0.0
        %1606 = vmatprep.subr.mxu0 0.0
        %1607 = vmatpush1.msra.mxu0 0.0
        %1608 = vmatprep.subr.mxu0 0.0
        %1609 = vmatpush1.msra.mxu0 0.0
        %1610 = vmatprep.subr.mxu0 0.0
        %1611 = vmatpush1.msra.mxu0 0.0
        %1612 = vmatprep.subr.mxu0 0.0
        %1613 = vmatpush1.msra.mxu0 0.0
        %1614 = vmatprep.subr.mxu0 0.0
        %1615 = vmatpush1.msra.mxu0 0.0
        %1616 = vmatprep.subr.mxu0 0.0
        %1617 = vmatpush1.msra.mxu0 0.0
        %1618 = vmatprep.subr.mxu0 0.0
        %1619 = vmatpush1.msra.mxu0 0.0
        %1620 = vmatprep.subr.mxu0 0.0
        %1621 = vmatpush1.msra.mxu0 0.0
        %1622 = vmatprep.subr.mxu0 0.0
        %1623 = vmatpush1.msra.mxu0 0.0
        %1624 = vmatprep.subr.mxu0 0.0
        %1625 = vmatpush1.msra.mxu0 0.0
        %1626 = vmatprep.subr.mxu0 0.0
        %1627 = vmatpush1.msra.mxu0 0.0
        %1628 = vmatprep.subr.mxu0 0.0
        %1629 = vmatpush1.msra.mxu0 0.0
        %1630 = vmatprep.subr.mxu0 0.0
        %1631 = vmatpush1.msra.mxu0 0.0
        %1632 = vmatprep.subr.mxu0 0.0
        %1633 = vmatpush1.msra.mxu0 0.0
        %1634 = vmatprep.subr.mxu0 0.0
        %1635 = vmatpush1.msra.mxu0 0.0
        %1636 = vmatprep.subr.mxu0 0.0
        %1637 = vmatpush1.msra.mxu0 0.0
        %1638 = vmatprep.subr.mxu0 0.0
        %1639 = vmatpush1.msra.mxu0 0.0
        %1640 = vmatprep.subr.mxu0 0.0
        %1641 = vmatpush1.msra.mxu0 0.0
        %1642 = vmatprep.subr.mxu0 0.0
        %1643 = vmatpush1.msra.mxu0 0.0
        %1644 = vmatprep.subr.mxu0 0.0
        %1645 = vmatpush1.msra.mxu0 0.0
        %1646 = vmatprep.subr.mxu0 0.0
        %1647 = vmatpush1.msra.mxu0 0.0
        %1648 = vmatprep.subr.mxu0 0.0
        %1649 = vmatpush1.msra.mxu0 0.0
        %1650 = vmatprep.subr.mxu0 0.0
        %1651 = vmatpush1.msra.mxu0 0.0
        %1652 = vmatprep.subr.mxu0 0.0
        %1653 = vmatpush1.msra.mxu0 0.0
        %1654 = vmatprep.subr.mxu0 0.0
        %1655 = vmatpush1.msra.mxu0 0.0
        %1656 = vmatprep.subr.mxu0 0.0
        %1657 = vmatpush1.msra.mxu0 0.0
        %1658 = vmatprep.subr.mxu0 0.0
        %1659 = vmatpush1.msra.mxu0 0.0
        %1660 = vmatprep.mubr.f32.mxu0 0.0
        %1661 = vmatmul.mubr.f32.gmra.mrb[0].mxu0 %v1590
        %v1662 = vpop.f32.mrb[0].mxu0
        %v1663 = vadd.f32 0.0, %v1662
        %v1664 = vpop.f32.mrb[0].mxu0
        %v1665 = vadd.f32 0.0, %v1664
        %1666 = vdwg.mxu0
        %v1667 = vadd.f32 %v1585, %v1663
        %v1668 = vadd.f32 %v1586, %v1665
        %1669 = vrot.lane.b32.xlu0 %v1212, 127
        %v1670 = vpop.permute.xlu0 %1669
        %1671 = vrot.lane.b32.xlu0 %v1213, 127
        %v1672 = vpop.permute.xlu0 %1671
        %v1673 = vrot.slane %v1670, 4
        %v1674 = vrot.slane %v1672, 4
        %v1675 = vsel %vm318, %v1673, %v1674
        %v1676 = vsel %vm600, %v1675, %v1672
        %v1678 = vmul.f32 %v1676, %v493
        %s1679 = scalar_lea.vmem %s3, 20
        %v1680 = vld [vmem:[%s1679] sm:$0xf]
        %v1682 = vcombine.high %v1678, %v1678
        %v1684 = vsel %vm314, %v1680, 0
        %v1686 = vsel %vm318, %v1678, 0
        %v1688 = vsel %vm318, %v1682, 0
        %1690 = vmatprep.subr.mxu0 %v1688
        %1691 = vmatpush1.msra.mxu0 %v1686
        %1692 = vmatprep.subr.mxu0 0.0
        %1693 = vmatpush1.msra.mxu0 0.0
        %1694 = vmatprep.subr.mxu0 0.0
        %1695 = vmatpush1.msra.mxu0 0.0
        %1696 = vmatprep.subr.mxu0 0.0
        %1697 = vmatpush1.msra.mxu0 0.0
        %1698 = vmatprep.subr.mxu0 0.0
        %1699 = vmatpush1.msra.mxu0 0.0
        %1700 = vmatprep.subr.mxu0 0.0
        %1701 = vmatpush1.msra.mxu0 0.0
        %1702 = vmatprep.subr.mxu0 0.0
        %1703 = vmatpush1.msra.mxu0 0.0
        %1704 = vmatprep.subr.mxu0 0.0
        %1705 = vmatpush1.msra.mxu0 0.0
        %1706 = vmatprep.subr.mxu0 0.0
        %1707 = vmatpush1.msra.mxu0 0.0
        %1708 = vmatprep.subr.mxu0 0.0
        %1709 = vmatpush1.msra.mxu0 0.0
        %1710 = vmatprep.subr.mxu0 0.0
        %1711 = vmatpush1.msra.mxu0 0.0
        %1712 = vmatprep.subr.mxu0 0.0
        %1713 = vmatpush1.msra.mxu0 0.0
        %1714 = vmatprep.subr.mxu0 0.0
        %1715 = vmatpush1.msra.mxu0 0.0
        %1716 = vmatprep.subr.mxu0 0.0
        %1717 = vmatpush1.msra.mxu0 0.0
        %1718 = vmatprep.subr.mxu0 0.0
        %1719 = vmatpush1.msra.mxu0 0.0
        %1720 = vmatprep.subr.mxu0 0.0
        %1721 = vmatpush1.msra.mxu0 0.0
        %1722 = vmatprep.subr.mxu0 0.0
        %1723 = vmatpush1.msra.mxu0 0.0
        %1724 = vmatprep.subr.mxu0 0.0
        %1725 = vmatpush1.msra.mxu0 0.0
        %1726 = vmatprep.subr.mxu0 0.0
        %1727 = vmatpush1.msra.mxu0 0.0
        %1728 = vmatprep.subr.mxu0 0.0
        %1729 = vmatpush1.msra.mxu0 0.0
        %1730 = vmatprep.subr.mxu0 0.0
        %1731 = vmatpush1.msra.mxu0 0.0
        %1732 = vmatprep.subr.mxu0 0.0
        %1733 = vmatpush1.msra.mxu0 0.0
        %1734 = vmatprep.subr.mxu0 0.0
        %1735 = vmatpush1.msra.mxu0 0.0
        %1736 = vmatprep.subr.mxu0 0.0
        %1737 = vmatpush1.msra.mxu0 0.0
        %1738 = vmatprep.subr.mxu0 0.0
        %1739 = vmatpush1.msra.mxu0 0.0
        %1740 = vmatprep.subr.mxu0 0.0
        %1741 = vmatpush1.msra.mxu0 0.0
        %1742 = vmatprep.subr.mxu0 0.0
        %1743 = vmatpush1.msra.mxu0 0.0
        %1744 = vmatprep.subr.mxu0 0.0
        %1745 = vmatpush1.msra.mxu0 0.0
        %1746 = vmatprep.subr.mxu0 0.0
        %1747 = vmatpush1.msra.mxu0 0.0
        %1748 = vmatprep.subr.mxu0 0.0
        %1749 = vmatpush1.msra.mxu0 0.0
        %1750 = vmatprep.subr.mxu0 0.0
        %1751 = vmatpush1.msra.mxu0 0.0
        %1752 = vmatprep.subr.mxu0 0.0
        %1753 = vmatpush1.msra.mxu0 0.0
        %1754 = vmatprep.mubr.f32.mxu0 0.0
        %1755 = vmatmul.mubr.f32.gmra.mrb[0].mxu0 %v1684
        %v1756 = vpop.f32.mrb[0].mxu0
        %v1757 = vadd.f32 0.0, %v1756
        %v1758 = vpop.f32.mrb[0].mxu0
        %v1759 = vadd.f32 0.0, %v1758
        %1760 = vdwg.mxu0
        %v1761 = vadd.f32 %v1667, %v1757
        %v1762 = vadd.f32 %v1668, %v1759
        %1763 = vrot.lane.b32.xlu0 %v1212, 113
        %v1764 = vpop.permute.xlu0 %1763
        %1765 = vrot.lane.b32.xlu0 %v1213, 113
        %v1766 = vpop.permute.xlu0 %1765
        %v1767 = vrot.slane %v1764, 4
        %v1768 = vrot.slane %v1766, 4
        %v1769 = vsel %vm318, %v1767, %v1768
        %v1770 = vsel %vm497, %v1769, %v1766
        %v1772 = vmul.f32 %v1770, %v289
        %s1773 = scalar_lea.vmem %s3, 24
        %v1774 = vld [vmem:[%s1773] sm:$0xf]
        %v1776 = vcombine.high %v1772, %v1772
        %v1778 = vsel %vm314, %v1774, 0
        %v1780 = vsel %vm318, %v1772, 0
        %v1782 = vsel %vm318, %v1776, 0
        %1784 = vmatprep.subr.mxu0 %v1782
        %1785 = vmatpush1.msra.mxu0 %v1780
        %1786 = vmatprep.subr.mxu0 0.0
        %1787 = vmatpush1.msra.mxu0 0.0
        %1788 = vmatprep.subr.mxu0 0.0
        %1789 = vmatpush1.msra.mxu0 0.0
        %1790 = vmatprep.subr.mxu0 0.0
        %1791 = vmatpush1.msra.mxu0 0.0
        %1792 = vmatprep.subr.mxu0 0.0
        %1793 = vmatpush1.msra.mxu0 0.0
        %1794 = vmatprep.subr.mxu0 0.0
        %1795 = vmatpush1.msra.mxu0 0.0
        %1796 = vmatprep.subr.mxu0 0.0
        %1797 = vmatpush1.msra.mxu0 0.0
        %1798 = vmatprep.subr.mxu0 0.0
        %1799 = vmatpush1.msra.mxu0 0.0
        %1800 = vmatprep.subr.mxu0 0.0
        %1801 = vmatpush1.msra.mxu0 0.0
        %1802 = vmatprep.subr.mxu0 0.0
        %1803 = vmatpush1.msra.mxu0 0.0
        %1804 = vmatprep.subr.mxu0 0.0
        %1805 = vmatpush1.msra.mxu0 0.0
        %1806 = vmatprep.subr.mxu0 0.0
        %1807 = vmatpush1.msra.mxu0 0.0
        %1808 = vmatprep.subr.mxu0 0.0
        %1809 = vmatpush1.msra.mxu0 0.0
        %1810 = vmatprep.subr.mxu0 0.0
        %1811 = vmatpush1.msra.mxu0 0.0
        %1812 = vmatprep.subr.mxu0 0.0
        %1813 = vmatpush1.msra.mxu0 0.0
        %1814 = vmatprep.subr.mxu0 0.0
        %1815 = vmatpush1.msra.mxu0 0.0
        %1816 = vmatprep.subr.mxu0 0.0
        %1817 = vmatpush1.msra.mxu0 0.0
        %1818 = vmatprep.subr.mxu0 0.0
        %1819 = vmatpush1.msra.mxu0 0.0
        %1820 = vmatprep.subr.mxu0 0.0
        %1821 = vmatpush1.msra.mxu0 0.0
        %1822 = vmatprep.subr.mxu0 0.0
        %1823 = vmatpush1.msra.mxu0 0.0
        %1824 = vmatprep.subr.mxu0 0.0
        %1825 = vmatpush1.msra.mxu0 0.0
        %1826 = vmatprep.subr.mxu0 0.0
        %1827 = vmatpush1.msra.mxu0 0.0
        %1828 = vmatprep.subr.mxu0 0.0
        %1829 = vmatpush1.msra.mxu0 0.0
        %1830 = vmatprep.subr.mxu0 0.0
        %1831 = vmatpush1.msra.mxu0 0.0
        %1832 = vmatprep.subr.mxu0 0.0
        %1833 = vmatpush1.msra.mxu0 0.0
        %1834 = vmatprep.subr.mxu0 0.0
        %1835 = vmatpush1.msra.mxu0 0.0
        %1836 = vmatprep.subr.mxu0 0.0
        %1837 = vmatpush1.msra.mxu0 0.0
        %1838 = vmatprep.subr.mxu0 0.0
        %1839 = vmatpush1.msra.mxu0 0.0
        %1840 = vmatprep.subr.mxu0 0.0
        %1841 = vmatpush1.msra.mxu0 0.0
        %1842 = vmatprep.subr.mxu0 0.0
        %1843 = vmatpush1.msra.mxu0 0.0
        %1844 = vmatprep.subr.mxu0 0.0
        %1845 = vmatpush1.msra.mxu0 0.0
        %1846 = vmatprep.subr.mxu0 0.0
        %1847 = vmatpush1.msra.mxu0 0.0
        %1848 = vmatprep.mubr.f32.mxu0 0.0
        %1849 = vmatmul.mubr.f32.gmra.mrb[0].mxu0 %v1778
        %v1850 = vpop.f32.mrb[0].mxu0
        %v1851 = vadd.f32 0.0, %v1850
        %v1852 = vpop.f32.mrb[0].mxu0
        %v1853 = vadd.f32 0.0, %v1852
        %1854 = vdwg.mxu0
        %v1855 = vadd.f32 %v1761, %v1851
        %v1856 = vadd.f32 %v1762, %v1853
        %s1857 = scalar_lea.vmem %s3, 28
        %v1858 = vld [vmem:[%s1857] sm:$0xf]
        %v1859 = vcombine.high %v1213, %v1213
        %1860 = vrot.lane.b32.xlu0 %v1221, 112
        %v1861 = vpop.permute.xlu0 %1860
        %1862 = vrot.lane.b32.xlu0 %v1213, 112
        %v1863 = vpop.permute.xlu0 %1862
        %1864 = vrot.lane.b32.xlu0 %v1859, 112
        %v1865 = vpop.permute.xlu0 %1864
        %v1866 = vsel %vm981, %v1861, %v1863
        %v1867 = vsel %vm981, %v1863, %v1865
        %v1869 = vsel %vm314, %v1858, 0
        %v1871 = vsel %vm318, %v1866, 0
        %v1873 = vsel %vm318, %v1867, 0
        %1875 = vmatprep.subr.mxu0 %v1873
        %1876 = vmatpush1.msra.mxu0 %v1871
        %1877 = vmatprep.subr.mxu0 0.0
        %1878 = vmatpush1.msra.mxu0 0.0
        %1879 = vmatprep.subr.mxu0 0.0
        %1880 = vmatpush1.msra.mxu0 0.0
        %1881 = vmatprep.subr.mxu0 0.0
        %1882 = vmatpush1.msra.mxu0 0.0
        %1883 = vmatprep.subr.mxu0 0.0
        %1884 = vmatpush1.msra.mxu0 0.0
        %1885 = vmatprep.subr.mxu0 0.0
        %1886 = vmatpush1.msra.mxu0 0.0
        %1887 = vmatprep.subr.mxu0 0.0
        %1888 = vmatpush1.msra.mxu0 0.0
        %1889 = vmatprep.subr.mxu0 0.0
        %1890 = vmatpush1.msra.mxu0 0.0
        %1891 = vmatprep.subr.mxu0 0.0
        %1892 = vmatpush1.msra.mxu0 0.0
        %1893 = vmatprep.subr.mxu0 0.0
        %1894 = vmatpush1.msra.mxu0 0.0
        %1895 = vmatprep.subr.mxu0 0.0
        %1896 = vmatpush1.msra.mxu0 0.0
        %1897 = vmatprep.subr.mxu0 0.0
        %1898 = vmatpush1.msra.mxu0 0.0
        %1899 = vmatprep.subr.mxu0 0.0
        %1900 = vmatpush1.msra.mxu0 0.0
        %1901 = vmatprep.subr.mxu0 0.0
        %1902 = vmatpush1.msra.mxu0 0.0
        %1903 = vmatprep.subr.mxu0 0.0
        %1904 = vmatpush1.msra.mxu0 0.0
        %1905 = vmatprep.subr.mxu0 0.0
        %1906 = vmatpush1.msra.mxu0 0.0
        %1907 = vmatprep.subr.mxu0 0.0
        %1908 = vmatpush1.msra.mxu0 0.0
        %1909 = vmatprep.subr.mxu0 0.0
        %1910 = vmatpush1.msra.mxu0 0.0
        %1911 = vmatprep.subr.mxu0 0.0
        %1912 = vmatpush1.msra.mxu0 0.0
        %1913 = vmatprep.subr.mxu0 0.0
        %1914 = vmatpush1.msra.mxu0 0.0
        %1915 = vmatprep.subr.mxu0 0.0
        %1916 = vmatpush1.msra.mxu0 0.0
        %1917 = vmatprep.subr.mxu0 0.0
        %1918 = vmatpush1.msra.mxu0 0.0
        %1919 = vmatprep.subr.mxu0 0.0
        %1920 = vmatpush1.msra.mxu0 0.0
        %1921 = vmatprep.subr.mxu0 0.0
        %1922 = vmatpush1.msra.mxu0 0.0
        %1923 = vmatprep.subr.mxu0 0.0
        %1924 = vmatpush1.msra.mxu0 0.0
        %1925 = vmatprep.subr.mxu0 0.0
        %1926 = vmatpush1.msra.mxu0 0.0
        %1927 = vmatprep.subr.mxu0 0.0
        %1928 = vmatpush1.msra.mxu0 0.0
        %1929 = vmatprep.subr.mxu0 0.0
        %1930 = vmatpush1.msra.mxu0 0.0
        %1931 = vmatprep.subr.mxu0 0.0
        %1932 = vmatpush1.msra.mxu0 0.0
        %1933 = vmatprep.subr.mxu0 0.0
        %1934 = vmatpush1.msra.mxu0 0.0
        %1935 = vmatprep.subr.mxu0 0.0
        %1936 = vmatpush1.msra.mxu0 0.0
        %1937 = vmatprep.subr.mxu0 0.0
        %1938 = vmatpush1.msra.mxu0 0.0
        %1939 = vmatprep.mubr.f32.mxu0 0.0
        %1940 = vmatmul.mubr.f32.gmra.mrb[0].mxu0 %v1869
        %v1941 = vpop.f32.mrb[0].mxu0
        %v1942 = vadd.f32 0.0, %v1941
        %v1943 = vpop.f32.mrb[0].mxu0
        %v1944 = vadd.f32 0.0, %v1943
        %1945 = vdwg.mxu0
        %v1946 = vadd.f32 %v1855, %v1942
        %v1947 = vadd.f32 %v1856, %v1944
        %1948 = vrot.lane.b32.xlu0 %v1212, 111
        %v1949 = vpop.permute.xlu0 %1948
        %1950 = vrot.lane.b32.xlu0 %v1213, 111
        %v1951 = vpop.permute.xlu0 %1950
        %v1952 = vrot.slane %v1949, 4
        %v1953 = vrot.slane %v1951, 4
        %v1954 = vsel %vm318, %v1952, %v1953
        %v1955 = vsel %vm293, %v1954, %v1951
        %v1957 = vmul.f32 %v1955, %v493
        %s1958 = scalar_lea.vmem %s3, 32
        %v1959 = vld [vmem:[%s1958] sm:$0xf]
        %v1961 = vcombine.high %v1957, %v1957
        %v1963 = vsel %vm314, %v1959, 0
        %v1965 = vsel %vm318, %v1957, 0
        %v1967 = vsel %vm318, %v1961, 0
        %1969 = vmatprep.subr.mxu0 %v1967
        %1970 = vmatpush1.msra.mxu0 %v1965
        %1971 = vmatprep.subr.mxu0 0.0
        %1972 = vmatpush1.msra.mxu0 0.0
        %1973 = vmatprep.subr.mxu0 0.0
        %1974 = vmatpush1.msra.mxu0 0.0
        %1975 = vmatprep.subr.mxu0 0.0
        %1976 = vmatpush1.msra.mxu0 0.0
        %1977 = vmatprep.subr.mxu0 0.0
        %1978 = vmatpush1.msra.mxu0 0.0
        %1979 = vmatprep.subr.mxu0 0.0
        %1980 = vmatpush1.msra.mxu0 0.0
        %1981 = vmatprep.subr.mxu0 0.0
        %1982 = vmatpush1.msra.mxu0 0.0
        %1983 = vmatprep.subr.mxu0 0.0
        %1984 = vmatpush1.msra.mxu0 0.0
        %1985 = vmatprep.subr.mxu0 0.0
        %1986 = vmatpush1.msra.mxu0 0.0
        %1987 = vmatprep.subr.mxu0 0.0
        %1988 = vmatpush1.msra.mxu0 0.0
        %1989 = vmatprep.subr.mxu0 0.0
        %1990 = vmatpush1.msra.mxu0 0.0
        %1991 = vmatprep.subr.mxu0 0.0
        %1992 = vmatpush1.msra.mxu0 0.0
        %1993 = vmatprep.subr.mxu0 0.0
        %1994 = vmatpush1.msra.mxu0 0.0
        %1995 = vmatprep.subr.mxu0 0.0
        %1996 = vmatpush1.msra.mxu0 0.0
        %1997 = vmatprep.subr.mxu0 0.0
        %1998 = vmatpush1.msra.mxu0 0.0
        %1999 = vmatprep.subr.mxu0 0.0
        %2000 = vmatpush1.msra.mxu0 0.0
        %2001 = vmatprep.subr.mxu0 0.0
        %2002 = vmatpush1.msra.mxu0 0.0
        %2003 = vmatprep.subr.mxu0 0.0
        %2004 = vmatpush1.msra.mxu0 0.0
        %2005 = vmatprep.subr.mxu0 0.0
        %2006 = vmatpush1.msra.mxu0 0.0
        %2007 = vmatprep.subr.mxu0 0.0
        %2008 = vmatpush1.msra.mxu0 0.0
        %2009 = vmatprep.subr.mxu0 0.0
        %2010 = vmatpush1.msra.mxu0 0.0
        %2011 = vmatprep.subr.mxu0 0.0
        %2012 = vmatpush1.msra.mxu0 0.0
        %2013 = vmatprep.subr.mxu0 0.0
        %2014 = vmatpush1.msra.mxu0 0.0
        %2015 = vmatprep.subr.mxu0 0.0
        %2016 = vmatpush1.msra.mxu0 0.0
        %2017 = vmatprep.subr.mxu0 0.0
        %2018 = vmatpush1.msra.mxu0 0.0
        %2019 = vmatprep.subr.mxu0 0.0
        %2020 = vmatpush1.msra.mxu0 0.0
        %2021 = vmatprep.subr.mxu0 0.0
        %2022 = vmatpush1.msra.mxu0 0.0
        %2023 = vmatprep.subr.mxu0 0.0
        %2024 = vmatpush1.msra.mxu0 0.0
        %2025 = vmatprep.subr.mxu0 0.0
        %2026 = vmatpush1.msra.mxu0 0.0
        %2027 = vmatprep.subr.mxu0 0.0
        %2028 = vmatpush1.msra.mxu0 0.0
        %2029 = vmatprep.subr.mxu0 0.0
        %2030 = vmatpush1.msra.mxu0 0.0
        %2031 = vmatprep.subr.mxu0 0.0
        %2032 = vmatpush1.msra.mxu0 0.0
        %2033 = vmatprep.mubr.f32.mxu0 0.0
        %2034 = vmatmul.mubr.f32.gmra.mrb[0].mxu0 %v1963
        %v2035 = vpop.f32.mrb[0].mxu0
        %v2036 = vadd.f32 0.0, %v2035
        %v2037 = vpop.f32.mrb[0].mxu0
        %v2038 = vadd.f32 0.0, %v2037
        %2039 = vdwg.mxu0
        %v2040 = vadd.f32 %v1946, %v2036
        %v2041 = vadd.f32 %v1947, %v2038
        %2043 = vset.pattern.permute.xlu0 0
        %2044 = vperm.xlu0 %2043, %v1211
        %v2045 = vpop.permute.xlu0 %2044
        %v2047 = vadd.f32 %v2040, %v2045
        %v2048 = vadd.f32 %v2041, %v2045
        %v2049 = vld [vmem:[%s269 + $0x8] sm:$0xf]
        %v2050 = vld [vmem:[%s269 + $0xc] sm:$0xf]
        %v2051 = vsel %vm318, %v2047, 0.0
        %v2052 = vsel %vm318, %v2048, 0.0
        %v2053 = vadd.f32 %v2051, %v2052
        %2054 = vadd.xlane.f32.xlu0 %v2053
        %v2055 = vpop.xlane.xlu0 %2054
        %v2056 = vmul.f32 %v2055, %v1172
        %v2057 = vsub.f32 %v2047, %v2056
        %v2058 = vsub.f32 %v2048, %v2056
        %v2059 = vmul.f32 %v2057, %v2057
        %v2060 = vmul.f32 %v2058, %v2058
        %v2061 = vsel %vm318, %v2059, 0.0
        %v2062 = vsel %vm318, %v2060, 0.0
        %v2063 = vadd.f32 %v2061, %v2062
        %2064 = vadd.xlane.f32.xlu0 %v2063
        %v2065 = vpop.xlane.xlu0 %2064
        %v2066 = vmul.f32 %v2065, %v1172
        %v2067 = vadd.f32 %v2066, 1e-05
        %v2068 = vrsqrt.pop %v2067
        %v2069 = vmul.f32 %v2057, %v2068
        %v2070 = vmul.f32 %v2058, %v2068
        %2072 = vset.pattern.permute.xlu0 0
        %2073 = vperm.xlu0 %2072, %v2049
        %v2074 = vpop.permute.xlu0 %2073
        %v2076 = vmul.f32 %v2074, %v2069
        %v2077 = vmul.f32 %v2074, %v2070
        %2079 = vset.pattern.permute.xlu0 0
        %2080 = vperm.xlu0 %2079, %v2050
        %v2081 = vpop.permute.xlu0 %2080
        %v2083 = vadd.f32 %v2076, %v2081
        %v2084 = vadd.f32 %v2077, %v2081
        %v2086 = vcombine.high %v273, %v273
        %v2088 = vadd.f32 %v2083, %v273
        %v2089 = vadd.f32 %v2084, %v2086
        %v2090 = vmax.f32 %v2088, 0.0
        %v2091 = vmax.f32 %v2089, 0.0
        %v2094 = vcombine.low %v2090, %v2091
        %2096 = vst [vmem:[%s259] sm:$0xff] %v2094
        %s2097 = sand.u32 %s164, 1
        %s2098 = scalar_lea.sflag [#allocation5], %s2097
        %s2099 = sand.u32 %s164, 1
        %s2100 = smul.addr %s2099, 8
        %s2101 = scalar_lea.vmem [#allocation4], %s2100
        // Predicated region
        $region45: #{tpu_custom_call.1} parent=43 // pred_check
          %p2102 = pneg %p174
        $region46: #{tpu_custom_call.1} parent=43 // pred_check_branch
          %2104 = sbr.rel (%p2102) target = $region48
        $region47: #{tpu_custom_call.1} parent=43 // pred_region
          %s2106 = ssub.s32 128, 128
          %2107 = vsyncadd %s2098, %s2106
          %s2108 = smul.addr %s20, 2
          %s2109 = smul.addr %s2108, 64
          %s2110 = scalar_lea.hbm %s6, %s2109
          %s2112 = sshll.u32 %s2101, 4
          %s2113 = int_to_ptr.vmem [resolvable:$true] %s2112
          %2115 = dma.vmem_to_hbm [thread:$0]  %s2113, 128, %s2110, %s2098
        $region48: #{tpu_custom_call.1} parent=43 // pred_fallthru
          _
      $region44: #{tpu_custom_call.1} parent=5 // pred_fallthru
        _
      %p2116 = scmp.le.s32.totalorder 2, %s15
      // Predicated region
      $region49: #{tpu_custom_call.1} parent=5 // pred_check
        %p2117 = pneg %p2116
      $region50: #{tpu_custom_call.1} parent=5 // pred_check_branch
        %2119 = sbr.rel (%p2117) target = $region52
      $region51: #{tpu_custom_call.1} parent=5 // pred_region
        %s2120 = ssub.s32 %s15, 2
        // Predicated region
        $region53: #{tpu_custom_call.1} parent=51 // pred_check
          %p2121 = pneg %p180
        $region54: #{tpu_custom_call.1} parent=51 // pred_check_branch
          %2123 = sbr.rel (%p2121) target = $region56
        $region55: #{tpu_custom_call.1} parent=51 // pred_region
          %s2124 = sand.u32 %s165, 1
          %s2125 = scalar_lea.sflag [#allocation5], %s2124
          %s2126 = sand.u32 %s165, 1
          %s2127 = smul.addr %s2126, 8
          %s2128 = scalar_lea.vmem [#allocation4], %s2127
          %2129 = dma.done %s2125, 128
        $region56: #{tpu_custom_call.1} parent=51 // pred_fallthru
          _
      $region52: #{tpu_custom_call.1} parent=5 // pred_fallthru
        _
    $region6: #{tpu_custom_call.1} parent=1 // loop_footer
      %s19 = sadd.s32 1, %s15
    $region7: #{tpu_custom_call.1} parent=1 // loop_footer_branch
      %14 = sbr.rel target = $region3
    $region8: #{tpu_custom_call.1} parent=1 // loop_exit
      _
    %2130 = vsyncpa [#allocation5], 1
    %s2131 = scalar_lea.sflag [#allocation5], 1
    %2132 = vsyncpa %s2131, 1

</llo_original>
